<compile_context>
chip_gen: v7x
topology: tpu7x:2x2x1
jax: 0.10.0
libtpu: 0.0.40
codegen_flags: <defaults>
</compile_context>

<pallas_src>
import functools
import math

import jax
import jax.numpy as jnp
from jax.experimental import pallas as pl
from jax.experimental.pallas import tpu as pltpu


def _round_up(x, m):
    return ((x + m - 1) // m) * m


def _pad_nodes(n):
    # small graphs: single tile (multiple of 8 sublanes); big graphs: 256-wide tiles
    return _round_up(n, 8) if n <= 256 else _round_up(n, 256)


def _tiles(n_pad):
    return (n_pad, n_pad) if n_pad <= 256 else (256, 256)


def graph_conv_kernel(a_ref, h_ref, w_ref, b_ref, out_ref, acc_ref, *,
                      aggregate_first, apply_relu, apply_log_softmax):
    """One GraphConv layer: out = act(A @ h @ W + b) for one (row-tile, k-tile)."""
    k = pl.program_id(1)

    @pl.when(k == 0)
    def _():
        acc_ref[...] = jnp.zeros_like(acc_ref)

    a_tile = a_ref[...]                       # bf16 (TM, TK)
    h_tile = h_ref[...]                       # bf16 (TK, F_in)
    if aggregate_first:
        # acc += A_tile @ h_tile          (cheaper when F_in <= F_out)
        acc_ref[...] += jnp.dot(a_tile, h_tile,
                                preferred_element_type=jnp.float32)
    else:
        # acc += A_tile @ (h_tile @ W)    (cheaper when F_out < F_in)
        xw = jnp.dot(h_tile, w_ref[...], preferred_element_type=jnp.float32)
        acc_ref[...] += jnp.dot(a_tile, xw.astype(jnp.bfloat16),
                                preferred_element_type=jnp.float32)

    @pl.when(k == pl.num_programs(1) - 1)
    def _():
        acc = acc_ref[...]
        if aggregate_first:
            acc = jnp.dot(acc.astype(jnp.bfloat16), w_ref[...],
                          preferred_element_type=jnp.float32)
        out = acc + b_ref[...]                # f32 bias, broadcasts over rows
        if apply_relu:
            out = jnp.maximum(out, 0.0)
        if apply_log_softmax:
            m = jnp.max(out, axis=1, keepdims=True)
            lse = m + jnp.log(jnp.sum(jnp.exp(out - m), axis=1, keepdims=True))
            out = out - lse
        out_ref[...] = out.astype(out_ref.dtype)


def graph_conv(adj_bf16, h_bf16, w_f32, b_f32, *, apply_relu, apply_log_softmax,
               out_dtype):
    n_pad = adj_bf16.shape[0]
    f_in, f_out = w_f32.shape
    aggregate_first = f_in <= f_out           # static Python decision
    tm, tk = _tiles(n_pad)
    grid = (n_pad // tm, n_pad // tk)
    acc_cols = f_in if aggregate_first else f_out

    kernel = functools.partial(graph_conv_kernel,
                               aggregate_first=aggregate_first,
                               apply_relu=apply_relu,
                               apply_log_softmax=apply_log_softmax)
    return pl.pallas_call(
        kernel,
        out_shape=jax.ShapeDtypeStruct((n_pad, f_out), out_dtype),
        grid_spec=pltpu.PrefetchScalarGridSpec(
            num_scalar_prefetch=0,
            grid=grid,
            in_specs=[
                pl.BlockSpec((tm, tk), lambda i, k: (i, k)),       # A tile
                pl.BlockSpec((tk, f_in), lambda i, k: (k, 0)),     # h rows for this k
                pl.BlockSpec((f_in, f_out), lambda i, k: (0, 0)),  # W (resident)
                pl.BlockSpec((1, f_out), lambda i, k: (0, 0)),     # bias (resident)
            ],
            out_specs=pl.BlockSpec((tm, f_out), lambda i, k: (i, 0)),
            scratch_shapes=[pltpu.VMEM((tm, acc_cols), jnp.float32)],
        ),
        compiler_params=pltpu.CompilerParams(
            dimension_semantics=("parallel", "arbitrary"),
            vmem_limit_bytes=32 * 1024 * 1024,   # explicit budget; tiles are tiny
        ),
    )(adj_bf16, h_bf16, w_f32.astype(jnp.bfloat16), b_f32.astype(jnp.float32))


@jax.jit
def gcn_forward(adj_norm, features, params):
    # TODO(synk): sparse_input=True path (nn.Linear on sparse features) not implemented;
    # module default dense path is used.
    n, f_in = features.shape
    n_classes = params[-1][0].shape[1]
    n_pad = _pad_nodes(n)

    adj = jnp.zeros((n_pad, n_pad), jnp.bfloat16).at[:n, :n].set(
        adj_norm.astype(jnp.bfloat16))
    h = jnp.zeros((n_pad, f_in), jnp.bfloat16).at[:n, :].set(
        features.astype(jnp.bfloat16))

    for idx, (w, b) in enumerate(params):
        last = idx == len(params) - 1
        if last:
            # lane-dense final output: pad class dim to 128; padded logits get a
            # -1e9 bias so the in-kernel log_softmax ignores them.
            c_pad = _round_up(n_classes, 128)
            w = jnp.zeros((w.shape[0], c_pad), jnp.float32).at[:, :n_classes].set(w)
            b = jnp.full((1, c_pad), -1e9, jnp.float32).at[:, :n_classes].set(b)
        # TODO(synk): nn.Dropout between layers is identity at inference (eval mode); omitted.
        h = graph_conv(adj, h, w, b,
                       apply_relu=not last,
                       apply_log_softmax=last,
                       out_dtype=jnp.float32 if last else jnp.bfloat16)
    return h[:n, :n_classes]


def gcn_reference(adj_norm, features, params):
    # pure-JAX f32 reference of the same forward pass
    h = features
    for idx, (w, b) in enumerate(params):
        h = adj_norm @ (h @ w) + b
        if idx != len(params) - 1:
            h = jnp.maximum(h, 0.0)
    return jax.nn.log_softmax(h, axis=1)


def glorot_uniform(key, shape):
    fan_in, fan_out = shape
    limit = math.sqrt(6.0 / (fan_in + fan_out))
    return jax.random.uniform(key, shape, jnp.float32, -limit, limit)


def make_params(key, in_feats, n_hidden, n_classes, n_layers):
    # layers: GraphConv(in, hid), (n_layers-1) x GraphConv(hid, hid), GraphConv(hid, classes)
    dims = [(in_feats, n_hidden)]
    for _ in range(n_layers - 1):
        dims.append((n_hidden, n_hidden))
    dims.append((n_hidden, n_classes))
    params = []
    for d in dims:
        key, sub = jax.random.split(key)
        w = glorot_uniform(sub, d)
        b = jnp.zeros((1, d[1]), jnp.float32)
        params.append((w, b))
    return params


def make_normalized_adj(key, n_nodes):
    # random undirected graph + self loops, symmetric normalization
    logits = jax.random.uniform(key, (n_nodes, n_nodes))
    a = (logits > 0.85).astype(jnp.float32)
    a = jnp.maximum(a, a.T)
    a = a + jnp.eye(n_nodes, dtype=jnp.float32)
    deg = jnp.sum(a, axis=1)
    d_inv_sqrt = 1.0 / jnp.sqrt(deg)
    return a * d_inv_sqrt[:, None] * d_inv_sqrt[None, :]


if __name__ == "__main__":
    N, IN_FEATS, N_HIDDEN, N_CLASSES, N_LAYERS = 64, 16, 32, 8, 2

    key = jax.random.PRNGKey(0)
    k_feat, k_adj, k_par = jax.random.split(key, 3)

    features = jax.random.normal(k_feat, (N, IN_FEATS), jnp.float32)
    adj_norm = make_normalized_adj(k_adj, N)
    params = make_params(k_par, IN_FEATS, N_HIDDEN, N_CLASSES, N_LAYERS)

    out = gcn_forward(adj_norm, features, params)
    out = jax.block_until_ready(out)

    assert out.shape == (N, N_CLASSES)
    # rows of log_softmax output must exponentiate-sum to ~1
    assert bool(jnp.allclose(jnp.sum(jnp.exp(out), axis=1), 1.0, atol=1e-4))
    # compare against pure-JAX f32 reference (bf16 MXU operands => loose tolerance)
    ref = gcn_reference(adj_norm, features, params)
    assert float(jnp.max(jnp.abs(out - ref))) < 5e-2
    print("KERNEL_OK")
</pallas_src>

<mosaic_0001>
module attributes {stable_mosaic.version = 11 : i64} {
  func.func @graph_conv_kernel(%arg0: i32, %arg1: i32, %arg2: memref<64x64xbf16, #tpu.memory_space<vmem>>, %arg3: memref<64x16xbf16, #tpu.memory_space<vmem>>, %arg4: memref<16x32xbf16, #tpu.memory_space<vmem>>, %arg5: memref<1x32xf32, #tpu.memory_space<vmem>>, %arg6: memref<64x32xbf16, #tpu.memory_space<vmem>>, %arg7: memref<64x16xf32, #tpu.memory_space<vmem>>) attributes {dimension_semantics = [#tpu.dimension_semantics<parallel>, #tpu.dimension_semantics<arbitrary>], iteration_bounds = array<i64: 1, 1>, scalar_prefetch = 0 : i64, scratch_operands = 1 : i64, tpu.core_type = #tpu.core_type<tc>, window_params = [{transform_indices = @transform_0, window_bounds = array<i64: 64, 64>}, {transform_indices = @transform_1, window_bounds = array<i64: 64, 16>}, {pipeline_mode = #tpu.pipeline_mode<synchronous>, transform_indices = @transform_2, window_bounds = array<i64: 16, 32>}, {pipeline_mode = #tpu.pipeline_mode<synchronous>, transform_indices = @transform_3, window_bounds = array<i64: 1, 32>}, {transform_indices = @transform_4, window_bounds = array<i64: 64, 32>}]} {
    %c0_i32 = arith.constant 0 : i32
    %0 = arith.cmpi eq, %arg1, %c0_i32 : i32
    %1 = arith.extui %0 : i1 to i32
    %c0_i32_0 = arith.constant 0 : i32
    %2 = arith.cmpi ne, %1, %c0_i32_0 : i32
    scf.if %2 {
      %cst_10 = arith.constant 0.000000e+00 : f32
      %12 = vector.broadcast %cst_10 : f32 to vector<64x16xf32>
      %c0_11 = arith.constant 0 : index
      %c0_12 = arith.constant 0 : index
      %13 = vector.load %arg7[%c0_11, %c0_12] : memref<64x16xf32, #tpu.memory_space<vmem>>, vector<64x16xf32>
      tpu.vector_store %arg7[%c0_11, %c0_12], %12 {strides = array<i32>} : memref<64x16xf32, #tpu.memory_space<vmem>>, vector<64x16xf32>,
    } else {
    }
    %c0 = arith.constant 0 : index
    %c0_1 = arith.constant 0 : index
    %3 = vector.load %arg2[%c0, %c0_1] : memref<64x64xbf16, #tpu.memory_space<vmem>>, vector<64x64xbf16>
    %c0_2 = arith.constant 0 : index
    %c0_3 = arith.constant 0 : index
    %4 = vector.load %arg3[%c0_2, %c0_3] : memref<64x16xbf16, #tpu.memory_space<vmem>>, vector<64x16xbf16>
    %c0_4 = arith.constant 0 : index
    %c0_5 = arith.constant 0 : index
    %5 = vector.load %arg7[%c0_4, %c0_5] : memref<64x16xf32, #tpu.memory_space<vmem>>, vector<64x16xf32>
    %cst = arith.constant dense<0.000000e+00> : vector<64x16xf32>
    %6 = tpu.matmul %3, %4, %cst {dimension_numbers = #tpu.dot_dimension_numbers<[1], [0], [0], [1], [0, 0, 1, 1], [], []>} : vector<64x64xbf16>, vector<64x16xbf16>, vector<64x16xf32> -> vector<64x16xf32>
    %7 = arith.addf %5, %6 : vector<64x16xf32>
    %c0_6 = arith.constant 0 : index
    %c0_7 = arith.constant 0 : index
    %8 = vector.load %arg7[%c0_6, %c0_7] : memref<64x16xf32, #tpu.memory_space<vmem>>, vector<64x16xf32>
    tpu.vector_store %arg7[%c0_6, %c0_7], %7 {strides = array<i32>} : memref<64x16xf32, #tpu.memory_space<vmem>>, vector<64x16xf32>,
    %c0_i32_8 = arith.constant 0 : i32
    %9 = arith.cmpi eq, %arg1, %c0_i32_8 : i32
    %10 = arith.extui %9 : i1 to i32
    %c0_i32_9 = arith.constant 0 : i32
    %11 = arith.cmpi ne, %10, %c0_i32_9 : i32
    scf.if %11 {
      %c0_10 = arith.constant 0 : index
      %c0_11 = arith.constant 0 : index
      %12 = vector.load %arg7[%c0_10, %c0_11] : memref<64x16xf32, #tpu.memory_space<vmem>>, vector<64x16xf32>
      %13 = arith.truncf %12 : vector<64x16xf32> to vector<64x16xbf16>
      %c0_12 = arith.constant 0 : index
      %c0_13 = arith.constant 0 : index
      %14 = vector.load %arg4[%c0_12, %c0_13] : memref<16x32xbf16, #tpu.memory_space<vmem>>, vector<16x32xbf16>
      %cst_14 = arith.constant dense<0.000000e+00> : vector<64x32xf32>
      %15 = tpu.matmul %13, %14, %cst_14 {dimension_numbers = #tpu.dot_dimension_numbers<[1], [0], [0], [1], [0, 0, 1, 1], [], []>} : vector<64x16xbf16>, vector<16x32xbf16>, vector<64x32xf32> -> vector<64x32xf32>
      %c0_15 = arith.constant 0 : index
      %c0_16 = arith.constant 0 : index
      %16 = vector.load %arg5[%c0_15, %c0_16] : memref<1x32xf32, #tpu.memory_space<vmem>>, vector<1x32xf32>
      %17 = vector.broadcast %16 : vector<1x32xf32> to vector<64x32xf32>
      %18 = arith.addf %15, %17 : vector<64x32xf32>
      %cst_17 = arith.constant 0.000000e+00 : f32
      %19 = vector.broadcast %cst_17 : f32 to vector<64x32xf32>
      %20 = arith.maximumf %18, %19 : vector<64x32xf32>
      %21 = arith.truncf %20 : vector<64x32xf32> to vector<64x32xbf16>
      %c0_18 = arith.constant 0 : index
      %c0_19 = arith.constant 0 : index
      %22 = vector.load %arg6[%c0_18, %c0_19] : memref<64x32xbf16, #tpu.memory_space<vmem>>, vector<64x32xbf16>
      tpu.vector_store %arg6[%c0_18, %c0_19], %21 {strides = array<i32>} : memref<64x32xbf16, #tpu.memory_space<vmem>>, vector<64x32xbf16>,
    } else {
    }
    return
  }
  func.func @transform_0(%arg0: i32, %arg1: i32) -> (i32, i32) {
    %c0_i32 = arith.constant 0 : i32
    return %arg0, %arg1 : i32, i32
  }
  func.func @transform_1(%arg0: i32, %arg1: i32) -> (i32, i32) {
    %c0_i32 = arith.constant 0 : i32
    %c0_i32_0 = arith.constant 0 : i32
    return %arg1, %c0_i32 : i32, i32
  }
  func.func @transform_2(%arg0: i32, %arg1: i32) -> (i32, i32) {
    %c0_i32 = arith.constant 0 : i32
    %c0_i32_0 = arith.constant 0 : i32
    %c0_i32_1 = arith.constant 0 : i32
    return %c0_i32, %c0_i32_0 : i32, i32
  }
  func.func @transform_3(%arg0: i32, %arg1: i32) -> (i32, i32) {
    %c0_i32 = arith.constant 0 : i32
    %c0_i32_0 = arith.constant 0 : i32
    %c0_i32_1 = arith.constant 0 : i32
    return %c0_i32, %c0_i32_0 : i32, i32
  }
  func.func @transform_4(%arg0: i32, %arg1: i32) -> (i32, i32) {
    %c0_i32 = arith.constant 0 : i32
    %c0_i32_0 = arith.constant 0 : i32
    return %arg0, %c0_i32 : i32, i32
  }
}

module attributes {stable_mosaic.version = 11 : i64} {
  func.func @graph_conv_kernel(%arg0: i32, %arg1: i32, %arg2: memref<64x64xbf16, #tpu.memory_space<vmem>>, %arg3: memref<64x32xbf16, #tpu.memory_space<vmem>>, %arg4: memref<32x32xbf16, #tpu.memory_space<vmem>>, %arg5: memref<1x32xf32, #tpu.memory_space<vmem>>, %arg6: memref<64x32xbf16, #tpu.memory_space<vmem>>, %arg7: memref<64x32xf32, #tpu.memory_space<vmem>>) attributes {dimension_semantics = [#tpu.dimension_semantics<parallel>, #tpu.dimension_semantics<arbitrary>], iteration_bounds = array<i64: 1, 1>, scalar_prefetch = 0 : i64, scratch_operands = 1 : i64, tpu.core_type = #tpu.core_type<tc>, window_params = [{transform_indices = @transform_0, window_bounds = array<i64: 64, 64>}, {transform_indices = @transform_1, window_bounds = array<i64: 64, 32>}, {pipeline_mode = #tpu.pipeline_mode<synchronous>, transform_indices = @transform_2, window_bounds = array<i64: 32, 32>}, {pipeline_mode = #tpu.pipeline_mode<synchronous>, transform_indices = @transform_3, window_bounds = array<i64: 1, 32>}, {transform_indices = @transform_4, window_bounds = array<i64: 64, 32>}]} {
    %c0_i32 = arith.constant 0 : i32
    %0 = arith.cmpi eq, %arg1, %c0_i32 : i32
    %1 = arith.extui %0 : i1 to i32
    %c0_i32_0 = arith.constant 0 : i32
    %2 = arith.cmpi ne, %1, %c0_i32_0 : i32
    scf.if %2 {
      %cst_10 = arith.constant 0.000000e+00 : f32
      %12 = vector.broadcast %cst_10 : f32 to vector<64x32xf32>
      %c0_11 = arith.constant 0 : index
      %c0_12 = arith.constant 0 : index
      %13 = vector.load %arg7[%c0_11, %c0_12] : memref<64x32xf32, #tpu.memory_space<vmem>>, vector<64x32xf32>
      tpu.vector_store %arg7[%c0_11, %c0_12], %12 {strides = array<i32>} : memref<64x32xf32, #tpu.memory_space<vmem>>, vector<64x32xf32>,
    } else {
    }
    %c0 = arith.constant 0 : index
    %c0_1 = arith.constant 0 : index
    %3 = vector.load %arg2[%c0, %c0_1] : memref<64x64xbf16, #tpu.memory_space<vmem>>, vector<64x64xbf16>
    %c0_2 = arith.constant 0 : index
    %c0_3 = arith.constant 0 : index
    %4 = vector.load %arg3[%c0_2, %c0_3] : memref<64x32xbf16, #tpu.memory_space<vmem>>, vector<64x32xbf16>
    %c0_4 = arith.constant 0 : index
    %c0_5 = arith.constant 0 : index
    %5 = vector.load %arg7[%c0_4, %c0_5] : memref<64x32xf32, #tpu.memory_space<vmem>>, vector<64x32xf32>
    %cst = arith.constant dense<0.000000e+00> : vector<64x32xf32>
    %6 = tpu.matmul %3, %4, %cst {dimension_numbers = #tpu.dot_dimension_numbers<[1], [0], [0], [1], [0, 0, 1, 1], [], []>} : vector<64x64xbf16>, vector<64x32xbf16>, vector<64x32xf32> -> vector<64x32xf32>
    %7 = arith.addf %5, %6 : vector<64x32xf32>
    %c0_6 = arith.constant 0 : index
    %c0_7 = arith.constant 0 : index
    %8 = vector.load %arg7[%c0_6, %c0_7] : memref<64x32xf32, #tpu.memory_space<vmem>>, vector<64x32xf32>
    tpu.vector_store %arg7[%c0_6, %c0_7], %7 {strides = array<i32>} : memref<64x32xf32, #tpu.memory_space<vmem>>, vector<64x32xf32>,
    %c0_i32_8 = arith.constant 0 : i32
    %9 = arith.cmpi eq, %arg1, %c0_i32_8 : i32
    %10 = arith.extui %9 : i1 to i32
    %c0_i32_9 = arith.constant 0 : i32
    %11 = arith.cmpi ne, %10, %c0_i32_9 : i32
    scf.if %11 {
      %c0_10 = arith.constant 0 : index
      %c0_11 = arith.constant 0 : index
      %12 = vector.load %arg7[%c0_10, %c0_11] : memref<64x32xf32, #tpu.memory_space<vmem>>, vector<64x32xf32>
      %13 = arith.truncf %12 : vector<64x32xf32> to vector<64x32xbf16>
      %c0_12 = arith.constant 0 : index
      %c0_13 = arith.constant 0 : index
      %14 = vector.load %arg4[%c0_12, %c0_13] : memref<32x32xbf16, #tpu.memory_space<vmem>>, vector<32x32xbf16>
      %cst_14 = arith.constant dense<0.000000e+00> : vector<64x32xf32>
      %15 = tpu.matmul %13, %14, %cst_14 {dimension_numbers = #tpu.dot_dimension_numbers<[1], [0], [0], [1], [0, 0, 1, 1], [], []>} : vector<64x32xbf16>, vector<32x32xbf16>, vector<64x32xf32> -> vector<64x32xf32>
      %c0_15 = arith.constant 0 : index
      %c0_16 = arith.constant 0 : index
      %16 = vector.load %arg5[%c0_15, %c0_16] : memref<1x32xf32, #tpu.memory_space<vmem>>, vector<1x32xf32>
      %17 = vector.broadcast %16 : vector<1x32xf32> to vector<64x32xf32>
      %18 = arith.addf %15, %17 : vector<64x32xf32>
      %cst_17 = arith.constant 0.000000e+00 : f32
      %19 = vector.broadcast %cst_17 : f32 to vector<64x32xf32>
      %20 = arith.maximumf %18, %19 : vector<64x32xf32>
      %21 = arith.truncf %20 : vector<64x32xf32> to vector<64x32xbf16>
      %c0_18 = arith.constant 0 : index
      %c0_19 = arith.constant 0 : index
      %22 = vector.load %arg6[%c0_18, %c0_19] : memref<64x32xbf16, #tpu.memory_space<vmem>>, vector<64x32xbf16>
      tpu.vector_store %arg6[%c0_18, %c0_19], %21 {strides = array<i32>} : memref<64x32xbf16, #tpu.memory_space<vmem>>, vector<64x32xbf16>,
    } else {
    }
    return
  }
  func.func @transform_0(%arg0: i32, %arg1: i32) -> (i32, i32) {
    %c0_i32 = arith.constant 0 : i32
    return %arg0, %arg1 : i32, i32
  }
  func.func @transform_1(%arg0: i32, %arg1: i32) -> (i32, i32) {
    %c0_i32 = arith.constant 0 : i32
    %c0_i32_0 = arith.constant 0 : i32
    return %arg1, %c0_i32 : i32, i32
  }
  func.func @transform_2(%arg0: i32, %arg1: i32) -> (i32, i32) {
    %c0_i32 = arith.constant 0 : i32
    %c0_i32_0 = arith.constant 0 : i32
    %c0_i32_1 = arith.constant 0 : i32
    return %c0_i32, %c0_i32_0 : i32, i32
  }
  func.func @transform_3(%arg0: i32, %arg1: i32) -> (i32, i32) {
    %c0_i32 = arith.constant 0 : i32
    %c0_i32_0 = arith.constant 0 : i32
    %c0_i32_1 = arith.constant 0 : i32
    return %c0_i32, %c0_i32_0 : i32, i32
  }
  func.func @transform_4(%arg0: i32, %arg1: i32) -> (i32, i32) {
    %c0_i32 = arith.constant 0 : i32
    %c0_i32_0 = arith.constant 0 : i32
    return %arg0, %c0_i32 : i32, i32
  }
}

module attributes {stable_mosaic.version = 11 : i64} {
  func.func @graph_conv_kernel(%arg0: i32, %arg1: i32, %arg2: memref<64x64xbf16, #tpu.memory_space<vmem>>, %arg3: memref<64x32xbf16, #tpu.memory_space<vmem>>, %arg4: memref<32x128xbf16, #tpu.memory_space<vmem>>, %arg5: memref<1x128xf32, #tpu.memory_space<vmem>>, %arg6: memref<64x128xf32, #tpu.memory_space<vmem>>, %arg7: memref<64x32xf32, #tpu.memory_space<vmem>>) attributes {dimension_semantics = [#tpu.dimension_semantics<parallel>, #tpu.dimension_semantics<arbitrary>], iteration_bounds = array<i64: 1, 1>, scalar_prefetch = 0 : i64, scratch_operands = 1 : i64, tpu.core_type = #tpu.core_type<tc>, window_params = [{transform_indices = @transform_0, window_bounds = array<i64: 64, 64>}, {transform_indices = @transform_1, window_bounds = array<i64: 64, 32>}, {pipeline_mode = #tpu.pipeline_mode<synchronous>, transform_indices = @transform_2, window_bounds = array<i64: 32, 128>}, {pipeline_mode = #tpu.pipeline_mode<synchronous>, transform_indices = @transform_3, window_bounds = array<i64: 1, 128>}, {transform_indices = @transform_4, window_bounds = array<i64: 64, 128>}]} {
    %c0_i32 = arith.constant 0 : i32
    %0 = arith.cmpi eq, %arg1, %c0_i32 : i32
    %1 = arith.extui %0 : i1 to i32
    %c0_i32_0 = arith.constant 0 : i32
    %2 = arith.cmpi ne, %1, %c0_i32_0 : i32
    scf.if %2 {
      %cst_10 = arith.constant 0.000000e+00 : f32
      %12 = vector.broadcast %cst_10 : f32 to vector<64x32xf32>
      %c0_11 = arith.constant 0 : index
      %c0_12 = arith.constant 0 : index
      %13 = vector.load %arg7[%c0_11, %c0_12] : memref<64x32xf32, #tpu.memory_space<vmem>>, vector<64x32xf32>
      tpu.vector_store %arg7[%c0_11, %c0_12], %12 {strides = array<i32>} : memref<64x32xf32, #tpu.memory_space<vmem>>, vector<64x32xf32>,
    } else {
    }
    %c0 = arith.constant 0 : index
    %c0_1 = arith.constant 0 : index
    %3 = vector.load %arg2[%c0, %c0_1] : memref<64x64xbf16, #tpu.memory_space<vmem>>, vector<64x64xbf16>
    %c0_2 = arith.constant 0 : index
    %c0_3 = arith.constant 0 : index
    %4 = vector.load %arg3[%c0_2, %c0_3] : memref<64x32xbf16, #tpu.memory_space<vmem>>, vector<64x32xbf16>
    %c0_4 = arith.constant 0 : index
    %c0_5 = arith.constant 0 : index
    %5 = vector.load %arg7[%c0_4, %c0_5] : memref<64x32xf32, #tpu.memory_space<vmem>>, vector<64x32xf32>
    %cst = arith.constant dense<0.000000e+00> : vector<64x32xf32>
    %6 = tpu.matmul %3, %4, %cst {dimension_numbers = #tpu.dot_dimension_numbers<[1], [0], [0], [1], [0, 0, 1, 1], [], []>} : vector<64x64xbf16>, vector<64x32xbf16>, vector<64x32xf32> -> vector<64x32xf32>
    %7 = arith.addf %5, %6 : vector<64x32xf32>
    %c0_6 = arith.constant 0 : index
    %c0_7 = arith.constant 0 : index
    %8 = vector.load %arg7[%c0_6, %c0_7] : memref<64x32xf32, #tpu.memory_space<vmem>>, vector<64x32xf32>
    tpu.vector_store %arg7[%c0_6, %c0_7], %7 {strides = array<i32>} : memref<64x32xf32, #tpu.memory_space<vmem>>, vector<64x32xf32>,
    %c0_i32_8 = arith.constant 0 : i32
    %9 = arith.cmpi eq, %arg1, %c0_i32_8 : i32
    %10 = arith.extui %9 : i1 to i32
    %c0_i32_9 = arith.constant 0 : i32
    %11 = arith.cmpi ne, %10, %c0_i32_9 : i32
    scf.if %11 {
      %c0_10 = arith.constant 0 : index
      %c0_11 = arith.constant 0 : index
      %12 = vector.load %arg7[%c0_10, %c0_11] : memref<64x32xf32, #tpu.memory_space<vmem>>, vector<64x32xf32>
      %13 = arith.truncf %12 : vector<64x32xf32> to vector<64x32xbf16>
      %c0_12 = arith.constant 0 : index
      %c0_13 = arith.constant 0 : index
      %14 = vector.load %arg4[%c0_12, %c0_13] : memref<32x128xbf16, #tpu.memory_space<vmem>>, vector<32x128xbf16>
      %cst_14 = arith.constant dense<0.000000e+00> : vector<64x128xf32>
      %15 = tpu.matmul %13, %14, %cst_14 {dimension_numbers = #tpu.dot_dimension_numbers<[1], [0], [0], [1], [0, 0, 1, 1], [], []>} : vector<64x32xbf16>, vector<32x128xbf16>, vector<64x128xf32> -> vector<64x128xf32>
      %c0_15 = arith.constant 0 : index
      %c0_16 = arith.constant 0 : index
      %16 = vector.load %arg5[%c0_15, %c0_16] : memref<1x128xf32, #tpu.memory_space<vmem>>, vector<1x128xf32>
      %17 = vector.broadcast %16 : vector<1x128xf32> to vector<64x128xf32>
      %18 = arith.addf %15, %17 : vector<64x128xf32>
      %cst_17 = arith.constant dense<0xFF800000> : vector<64xf32>
      %19 = vector.multi_reduction <maximumf>, %18, %cst_17 [1] : vector<64x128xf32> to vector<64xf32>
      %20 = vector.shape_cast %19 : vector<64xf32> to vector<64x1xf32>
      %21 = vector.broadcast %20 : vector<64x1xf32> to vector<64x128xf32>
      %22 = arith.subf %18, %21 : vector<64x128xf32>
      %23 = math.exp %22 : vector<64x128xf32>
      %cst_18 = arith.constant dense<0.000000e+00> : vector<64xf32>
      %24 = vector.multi_reduction <add>, %23, %cst_18 [1] : vector<64x128xf32> to vector<64xf32>
      %25 = vector.shape_cast %24 : vector<64xf32> to vector<64x1xf32>
      %26 = math.log %25 : vector<64x1xf32>
      %27 = arith.addf %20, %26 : vector<64x1xf32>
      %28 = vector.broadcast %27 : vector<64x1xf32> to vector<64x128xf32>
      %29 = arith.subf %18, %28 : vector<64x128xf32>
      %c0_19 = arith.constant 0 : index
      %c0_20 = arith.constant 0 : index
      %30 = vector.load %arg6[%c0_19, %c0_20] : memref<64x128xf32, #tpu.memory_space<vmem>>, vector<64x128xf32>
      tpu.vector_store %arg6[%c0_19, %c0_20], %29 {strides = array<i32>} : memref<64x128xf32, #tpu.memory_space<vmem>>, vector<64x128xf32>,
    } else {
    }
    return
  }
  func.func @transform_0(%arg0: i32, %arg1: i32) -> (i32, i32) {
    %c0_i32 = arith.constant 0 : i32
    return %arg0, %arg1 : i32, i32
  }
  func.func @transform_1(%arg0: i32, %arg1: i32) -> (i32, i32) {
    %c0_i32 = arith.constant 0 : i32
    %c0_i32_0 = arith.constant 0 : i32
    return %arg1, %c0_i32 : i32, i32
  }
  func.func @transform_2(%arg0: i32, %arg1: i32) -> (i32, i32) {
    %c0_i32 = arith.constant 0 : i32
    %c0_i32_0 = arith.constant 0 : i32
    %c0_i32_1 = arith.constant 0 : i32
    return %c0_i32, %c0_i32_0 : i32, i32
  }
  func.func @transform_3(%arg0: i32, %arg1: i32) -> (i32, i32) {
    %c0_i32 = arith.constant 0 : i32
    %c0_i32_0 = arith.constant 0 : i32
    %c0_i32_1 = arith.constant 0 : i32
    return %c0_i32, %c0_i32_0 : i32, i32
  }
  func.func @transform_4(%arg0: i32, %arg1: i32) -> (i32, i32) {
    %c0_i32 = arith.constant 0 : i32
    %c0_i32_0 = arith.constant 0 : i32
    return %arg0, %c0_i32 : i32, i32
  }
}

</mosaic_0001>

<llo_original>
// kernel: gcn_forward.3
$region0: #{gcn_forward.3}
  #allocation0 [shape = 'u32[]', space=smem, size = 0x4, offset = 0x4, fixed_abs, tag = 'smem constant byte address 0x4 - core index']
  #allocation1 [shape = 'u32[144,128]{1,0:T(1,128)}', space=vmem, size = 0x12000, scoped, tag = 'internal scratch']
  #allocation2 [shape = 'f32[64,16]{1,0:T(8,128)}', space=vmem, size = 0x8000, scoped, tag = 'scratch operand']
  %s0 = inlined_call_operand.vmem [shape: bf16[64,64], index: 0, kind: input, shape index: {}]
  %s1 = inlined_call_operand.vmem [shape: bf16[64,16], index: 1, kind: input, shape index: {}]
  %s2 = inlined_call_operand.vmem [shape: bf16[16,32], index: 2, kind: input, shape index: {}]
  %s3 = inlined_call_operand.vmem [shape: f32[1,32], index: 3, kind: input, shape index: {}]
  %s4 = inlined_call_operand.vmem [shape: bf16[64,32], index: 4, kind: output, shape index: {}]
  %s5 = sld [smem:[#allocation0]]
  $region34: #{gcn_forward.3} parent=0
    _
  %s7 = ssub.s32 1, %s5
  %s8 = scalar_select 0, %s7, %s5
  // Predicated region
  $region2: #{gcn_forward.3} parent=0 // pred_check
    _
  $region3: #{gcn_forward.3} parent=0 // pred_check_branch
    %10 = sbr.rel (0) target = $region5
  $region4: #{gcn_forward.3} parent=0 // pred_region
    _
  $region5: #{gcn_forward.3} parent=0 // pred_fallthru
    _
  // Predicated region
  $region6: #{gcn_forward.3} parent=0 // pred_check
    _
  $region7: #{gcn_forward.3} parent=0 // pred_check_branch
    %12 = sbr.rel (0) target = $region9
  $region8: #{gcn_forward.3} parent=0 // pred_region
    _
  $region9: #{gcn_forward.3} parent=0 // pred_fallthru
    _
  // Predicated region
  $region10: #{gcn_forward.3} parent=0 // pred_check
    _
  $region11: #{gcn_forward.3} parent=0 // pred_check_branch
    %14 = sbr.rel (0) target = $region13
  $region12: #{gcn_forward.3} parent=0 // pred_region
    _
  $region13: #{gcn_forward.3} parent=0 // pred_fallthru
    _
  // Predicated region
  $region14: #{gcn_forward.3} parent=0 // pred_check
    _
  $region15: #{gcn_forward.3} parent=0 // pred_check_branch
    %16 = sbr.rel (0) target = $region17
  $region16: #{gcn_forward.3} parent=0 // pred_region
    _
  $region17: #{gcn_forward.3} parent=0 // pred_fallthru
    _
  %p18 = scmp.eq.s32.totalorder 0, 0
  // Predicated region
  $region18: #{gcn_forward.3} parent=0 // pred_check
    %p19 = pneg %p18
  $region19: #{gcn_forward.3} parent=0 // pred_check_branch
    %21 = sbr.rel (%p19) target = $region21
  $region20: #{gcn_forward.3} parent=0 // pred_region
    %vm22 = vcmask 130048
    %23 = vst.msk [vmem:[#allocation2] sm:$0xff] %vm22, 0.0
    %24 = vst.msk [vmem:[#allocation2 + $0x8] sm:$0xff] %vm22, 0.0
    %25 = vst.msk [vmem:[#allocation2 + $0x10] sm:$0xff] %vm22, 0.0
    %26 = vst.msk [vmem:[#allocation2 + $0x18] sm:$0xff] %vm22, 0.0
    %27 = vst.msk [vmem:[#allocation2 + $0x20] sm:$0xff] %vm22, 0.0
    %28 = vst.msk [vmem:[#allocation2 + $0x28] sm:$0xff] %vm22, 0.0
    %29 = vst.msk [vmem:[#allocation2 + $0x30] sm:$0xff] %vm22, 0.0
    %30 = vst.msk [vmem:[#allocation2 + $0x38] sm:$0xff] %vm22, 0.0
  $region21: #{gcn_forward.3} parent=0 // pred_fallthru
    _
  %v31 = vld [vmem:[%s0] sm:$0xf]
  %v32 = vld [vmem:[%s0 + $0x4] sm:$0xf]
  %v33 = vld [vmem:[%s0 + $0x8] sm:$0xf]
  %v34 = vld [vmem:[%s0 + $0xc] sm:$0xf]
  %v35 = vld [vmem:[%s0 + $0x10] sm:$0xf]
  %v36 = vld [vmem:[%s0 + $0x14] sm:$0xf]
  %v37 = vld [vmem:[%s0 + $0x18] sm:$0xf]
  %v38 = vld [vmem:[%s0 + $0x1c] sm:$0xf]
  %v39 = vld [vmem:[%s1] sm:$0xf]
  %v40 = vld [vmem:[%s1 + $0x4] sm:$0xf]
  %v41 = vld [vmem:[%s1 + $0x8] sm:$0xf]
  %v42 = vld [vmem:[%s1 + $0xc] sm:$0xf]
  %v43 = vld [vmem:[%s1 + $0x10] sm:$0xf]
  %v44 = vld [vmem:[%s1 + $0x14] sm:$0xf]
  %v45 = vld [vmem:[%s1 + $0x18] sm:$0xf]
  %v46 = vld [vmem:[%s1 + $0x1c] sm:$0xf]
  %v47 = vld [vmem:[#allocation2] sm:$0xff]
  %v48 = vld [vmem:[#allocation2 + $0x8] sm:$0xff]
  %v49 = vld [vmem:[#allocation2 + $0x10] sm:$0xff]
  %v50 = vld [vmem:[#allocation2 + $0x18] sm:$0xff]
  %v51 = vld [vmem:[#allocation2 + $0x20] sm:$0xff]
  %v52 = vld [vmem:[#allocation2 + $0x28] sm:$0xff]
  %v53 = vld [vmem:[#allocation2 + $0x30] sm:$0xff]
  %v54 = vld [vmem:[#allocation2 + $0x38] sm:$0xff]
  %v63 = vunpack.c.l.b16 %v31
  %v64 = vunpack.c.l.b16 %v32
  %v65 = vunpack.c.l.b16 %v33
  %v66 = vunpack.c.l.b16 %v34
  %v67 = vunpack.c.l.b16 %v35
  %v68 = vunpack.c.l.b16 %v36
  %v69 = vunpack.c.l.b16 %v37
  %v70 = vunpack.c.l.b16 %v38
  %v71 = vpack.c.b16 %v64, %v63
  %v72 = vpack.c.b16 %v66, %v65
  %v73 = vpack.c.b16 %v68, %v67
  %v74 = vpack.c.b16 %v70, %v69
  %v83 = vunpack.c.l.b16 %v39
  %v84 = vunpack.c.l.b16 %v40
  %v85 = vunpack.c.l.b16 %v41
  %v86 = vunpack.c.l.b16 %v42
  %v87 = vunpack.c.l.b16 %v43
  %v88 = vunpack.c.l.b16 %v44
  %v89 = vunpack.c.l.b16 %v45
  %v90 = vunpack.c.l.b16 %v46
  %v91 = vpack.c.b16 %v84, %v83
  %v92 = vpack.c.b16 %v86, %v85
  %v93 = vpack.c.b16 %v88, %v87
  %v94 = vpack.c.b16 %v90, %v89
  %vm99 = vcmask 523264
  %v101 = vsel %vm99, %v71, 0
  %v104 = vsel %vm99, %v72, 0
  %v107 = vsel %vm99, %v73, 0
  %v110 = vsel %vm99, %v74, 0
  %112 = vmatprep.subr.bf16.mxu0 0
  %113 = vmatpush1.bf16.msra.mxu0 %v91
  %114 = vmatprep.subr.bf16.mxu0 0
  %115 = vmatpush1.bf16.msra.mxu0 %v92
  %116 = vmatprep.subr.bf16.mxu0 0
  %117 = vmatpush1.bf16.msra.mxu0 %v93
  %118 = vmatprep.subr.bf16.mxu0 0
  %119 = vmatpush1.bf16.msra.mxu0 %v94
  %120 = vmatprep.subr.bf16.mxu0 0
  %121 = vmatpush1.bf16.msra.mxu0 0
  %122 = vmatprep.subr.bf16.mxu0 0
  %123 = vmatpush1.bf16.msra.mxu0 0
  %124 = vmatprep.subr.bf16.mxu0 0
  %125 = vmatpush1.bf16.msra.mxu0 0
  %126 = vmatprep.subr.bf16.mxu0 0
  %127 = vmatpush1.bf16.msra.mxu0 0
  %128 = vmatprep.subr.bf16.mxu0 0
  %129 = vmatpush1.bf16.msra.mxu0 0
  %130 = vmatprep.subr.bf16.mxu0 0
  %131 = vmatpush1.bf16.msra.mxu0 0
  %132 = vmatprep.subr.bf16.mxu0 0
  %133 = vmatpush1.bf16.msra.mxu0 0
  %134 = vmatprep.subr.bf16.mxu0 0
  %135 = vmatpush1.bf16.msra.mxu0 0
  %136 = vmatprep.subr.bf16.mxu0 0
  %137 = vmatpush1.bf16.msra.mxu0 0
  %138 = vmatprep.subr.bf16.mxu0 0
  %139 = vmatpush1.bf16.msra.mxu0 0
  %140 = vmatprep.subr.bf16.mxu0 0
  %141 = vmatpush1.bf16.msra.mxu0 0
  %142 = vmatprep.subr.bf16.mxu0 0
  %143 = vmatpush1.bf16.msra.mxu0 0
  %144 = vmatprep.mubr.bf16.mxu0 0
  %145 = vmatmul.mubr.bf16.gmra.mrb[0].mxu0 %v101
  %v146 = vpop.f32.mrb[0].mxu0
  %v147 = vadd.f32 0.0, %v146
  %v148 = vpop.f32.mrb[0].mxu0
  %v149 = vpop.f32.mrb[0].mxu0
  %v150 = vadd.f32 0.0, %v149
  %v151 = vpop.f32.mrb[0].mxu0
  %152 = vmatprep.mubr.bf16.mxu0 0
  %153 = vmatmul.mubr.bf16.gmra.mrb[0].mxu0 %v104
  %v154 = vpop.f32.mrb[0].mxu0
  %v155 = vadd.f32 0.0, %v154
  %v156 = vpop.f32.mrb[0].mxu0
  %v157 = vpop.f32.mrb[0].mxu0
  %v158 = vadd.f32 0.0, %v157
  %v159 = vpop.f32.mrb[0].mxu0
  %160 = vmatprep.mubr.bf16.mxu0 0
  %161 = vmatmul.mubr.bf16.gmra.mrb[0].mxu0 %v107
  %v162 = vpop.f32.mrb[0].mxu0
  %v163 = vadd.f32 0.0, %v162
  %v164 = vpop.f32.mrb[0].mxu0
  %v165 = vpop.f32.mrb[0].mxu0
  %v166 = vadd.f32 0.0, %v165
  %v167 = vpop.f32.mrb[0].mxu0
  %168 = vmatprep.mubr.bf16.mxu0 0
  %169 = vmatmul.mubr.bf16.gmra.mrb[0].mxu0 %v110
  %v170 = vpop.f32.mrb[0].mxu0
  %v171 = vadd.f32 0.0, %v170
  %v172 = vpop.f32.mrb[0].mxu0
  %v173 = vpop.f32.mrb[0].mxu0
  %v174 = vadd.f32 0.0, %v173
  %v175 = vpop.f32.mrb[0].mxu0
  %176 = vdwg.mxu0
  %v177 = vadd.f32 %v47, %v147
  %v178 = vadd.f32 %v48, %v150
  %v179 = vadd.f32 %v49, %v155
  %v180 = vadd.f32 %v50, %v158
  %v181 = vadd.f32 %v51, %v163
  %v182 = vadd.f32 %v52, %v166
  %v183 = vadd.f32 %v53, %v171
  %v184 = vadd.f32 %v54, %v174
  %vm185 = vcmask 130048
  %186 = vst.msk [vmem:[#allocation2] sm:$0xff] %vm185, %v177
  %187 = vst.msk [vmem:[#allocation2 + $0x8] sm:$0xff] %vm185, %v178
  %188 = vst.msk [vmem:[#allocation2 + $0x10] sm:$0xff] %vm185, %v179
  %189 = vst.msk [vmem:[#allocation2 + $0x18] sm:$0xff] %vm185, %v180
  %190 = vst.msk [vmem:[#allocation2 + $0x20] sm:$0xff] %vm185, %v181
  %191 = vst.msk [vmem:[#allocation2 + $0x28] sm:$0xff] %vm185, %v182
  %192 = vst.msk [vmem:[#allocation2 + $0x30] sm:$0xff] %vm185, %v183
  %193 = vst.msk [vmem:[#allocation2 + $0x38] sm:$0xff] %vm185, %v184
  // Predicated region
  $region22: #{gcn_forward.3} parent=0 // pred_check
    %p194 = pneg %p18
  $region23: #{gcn_forward.3} parent=0 // pred_check_branch
    %196 = sbr.rel (%p194) target = $region25
  $region24: #{gcn_forward.3} parent=0 // pred_region
    %v197 = vld [vmem:[#allocation2] sm:$0xff]
    %v198 = vld [vmem:[#allocation2 + $0x8] sm:$0xff]
    %v199 = vld [vmem:[#allocation2 + $0x10] sm:$0xff]
    %v200 = vld [vmem:[#allocation2 + $0x18] sm:$0xff]
    %v201 = vld [vmem:[#allocation2 + $0x20] sm:$0xff]
    %v202 = vld [vmem:[#allocation2 + $0x28] sm:$0xff]
    %v203 = vld [vmem:[#allocation2 + $0x30] sm:$0xff]
    %v204 = vld [vmem:[#allocation2 + $0x38] sm:$0xff]
    %v205 = vpack.c.bf16 %v198, %v197
    %v206 = vpack.c.bf16 %v200, %v199
    %v207 = vpack.c.bf16 %v202, %v201
    %v208 = vpack.c.bf16 %v204, %v203
    %v209 = vld [vmem:[%s2] sm:$0xf]
    %v210 = vld [vmem:[%s2 + $0x4] sm:$0xf]
    %v211 = vld [vmem:[%s3] sm:$0x1]
    %v213 = vlaneseq
    %v214 = vshrl.u32 %v213, 7
    %v215 = vsub.s32 0, %v214
    %v216 = vrot.slane %v211, %v215
    %v220 = vunpack.c.l.b16 %v209
    %v221 = vunpack.c.l.b16 %v210
    %v222 = vpack.c.b16 %v221, %v220
    %v225 = vsel %vm185, %v205, 0
    %v228 = vsel %vm185, %v206, 0
    %v231 = vsel %vm185, %v207, 0
    %v234 = vsel %vm185, %v208, 0
    %236 = vmatprep.subr.bf16.mxu0 0
    %237 = vmatpush1.bf16.msra.mxu0 %v222
    %238 = vmatprep.subr.bf16.mxu0 0
    %239 = vmatpush1.bf16.msra.mxu0 0
    %240 = vmatprep.subr.bf16.mxu0 0
    %241 = vmatpush1.bf16.msra.mxu0 0
    %242 = vmatprep.subr.bf16.mxu0 0
    %243 = vmatpush1.bf16.msra.mxu0 0
    %244 = vmatprep.subr.bf16.mxu0 0
    %245 = vmatpush1.bf16.msra.mxu0 0
    %246 = vmatprep.subr.bf16.mxu0 0
    %247 = vmatpush1.bf16.msra.mxu0 0
    %248 = vmatprep.subr.bf16.mxu0 0
    %249 = vmatpush1.bf16.msra.mxu0 0
    %250 = vmatprep.subr.bf16.mxu0 0
    %251 = vmatpush1.bf16.msra.mxu0 0
    %252 = vmatprep.subr.bf16.mxu0 0
    %253 = vmatpush1.bf16.msra.mxu0 0
    %254 = vmatprep.subr.bf16.mxu0 0
    %255 = vmatpush1.bf16.msra.mxu0 0
    %256 = vmatprep.subr.bf16.mxu0 0
    %257 = vmatpush1.bf16.msra.mxu0 0
    %258 = vmatprep.subr.bf16.mxu0 0
    %259 = vmatpush1.bf16.msra.mxu0 0
    %260 = vmatprep.subr.bf16.mxu0 0
    %261 = vmatpush1.bf16.msra.mxu0 0
    %262 = vmatprep.subr.bf16.mxu0 0
    %263 = vmatpush1.bf16.msra.mxu0 0
    %264 = vmatprep.subr.bf16.mxu0 0
    %265 = vmatpush1.bf16.msra.mxu0 0
    %266 = vmatprep.subr.bf16.mxu0 0
    %267 = vmatpush1.bf16.msra.mxu0 0
    %268 = vmatprep.mubr.bf16.mxu0 0
    %269 = vmatmul.mubr.bf16.gmra.mrb[0].mxu0 %v225
    %v270 = vpop.f32.mrb[0].mxu0
    %v271 = vadd.f32 %v216, %v270
    %v272 = vpop.f32.mrb[0].mxu0
    %v273 = vpop.f32.mrb[0].mxu0
    %v274 = vadd.f32 %v216, %v273
    %v275 = vpop.f32.mrb[0].mxu0
    %276 = vmatprep.mubr.bf16.mxu0 0
    %277 = vmatmul.mubr.bf16.gmra.mrb[0].mxu0 %v228
    %v278 = vpop.f32.mrb[0].mxu0
    %v279 = vadd.f32 %v216, %v278
    %v280 = vpop.f32.mrb[0].mxu0
    %v281 = vpop.f32.mrb[0].mxu0
    %v282 = vadd.f32 %v216, %v281
    %v283 = vpop.f32.mrb[0].mxu0
    %284 = vmatprep.mubr.bf16.mxu0 0
    %285 = vmatmul.mubr.bf16.gmra.mrb[0].mxu0 %v231
    %v286 = vpop.f32.mrb[0].mxu0
    %v287 = vadd.f32 %v216, %v286
    %v288 = vpop.f32.mrb[0].mxu0
    %v289 = vpop.f32.mrb[0].mxu0
    %v290 = vadd.f32 %v216, %v289
    %v291 = vpop.f32.mrb[0].mxu0
    %292 = vmatprep.mubr.bf16.mxu0 0
    %293 = vmatmul.mubr.bf16.gmra.mrb[0].mxu0 %v234
    %v294 = vpop.f32.mrb[0].mxu0
    %v295 = vadd.f32 %v216, %v294
    %v296 = vpop.f32.mrb[0].mxu0
    %v297 = vpop.f32.mrb[0].mxu0
    %v298 = vadd.f32 %v216, %v297
    %v299 = vpop.f32.mrb[0].mxu0
    %300 = vdwg.mxu0
    %v301 = vmax.f32 %v271, 0.0
    %v302 = vmax.f32 %v274, 0.0
    %v303 = vmax.f32 %v279, 0.0
    %v304 = vmax.f32 %v282, 0.0
    %v305 = vmax.f32 %v287, 0.0
    %v306 = vmax.f32 %v290, 0.0
    %v307 = vmax.f32 %v295, 0.0
    %v308 = vmax.f32 %v298, 0.0
    %v309 = vpack.c.bf16 %v302, %v301
    %v310 = vpack.c.bf16 %v304, %v303
    %v311 = vpack.c.bf16 %v306, %v305
    %v312 = vpack.c.bf16 %v308, %v307
    %v317 = vunpack.c.l.b16 %v309
    %v318 = vunpack.c.h.b16 %v309
    %v319 = vunpack.c.l.b16 %v310
    %v320 = vunpack.c.h.b16 %v310
    %v321 = vunpack.c.l.b16 %v311
    %v322 = vunpack.c.h.b16 %v311
    %v323 = vunpack.c.l.b16 %v312
    %v324 = vunpack.c.h.b16 %v312
    %v325 = vpack.c.b16 %v317, %v317
    %v326 = vpack.c.b16 %v318, %v318
    %v327 = vpack.c.b16 %v319, %v319
    %v328 = vpack.c.b16 %v320, %v320
    %v329 = vpack.c.b16 %v321, %v321
    %v330 = vpack.c.b16 %v322, %v322
    %v331 = vpack.c.b16 %v323, %v323
    %v332 = vpack.c.b16 %v324, %v324
    %vm341 = vcmask 257024
    %342 = vst.msk [vmem:[%s4] sm:$0xf] %vm341, %v325
    %343 = vst.msk [vmem:[%s4 + $0x4] sm:$0xf] %vm341, %v326
    %344 = vst.msk [vmem:[%s4 + $0x8] sm:$0xf] %vm341, %v327
    %345 = vst.msk [vmem:[%s4 + $0xc] sm:$0xf] %vm341, %v328
    %346 = vst.msk [vmem:[%s4 + $0x10] sm:$0xf] %vm341, %v329
    %347 = vst.msk [vmem:[%s4 + $0x14] sm:$0xf] %vm341, %v330
    %348 = vst.msk [vmem:[%s4 + $0x18] sm:$0xf] %vm341, %v331
    %349 = vst.msk [vmem:[%s4 + $0x1c] sm:$0xf] %vm341, %v332
  $region25: #{gcn_forward.3} parent=0 // pred_fallthru
    _
  // Predicated region
  $region26: #{gcn_forward.3} parent=0 // pred_check
    _
  $region27: #{gcn_forward.3} parent=0 // pred_check_branch
    %351 = sbr.rel (0) target = $region29
  $region28: #{gcn_forward.3} parent=0 // pred_region
    _
  $region29: #{gcn_forward.3} parent=0 // pred_fallthru
    _
  // Predicated region
  $region30: #{gcn_forward.3} parent=0 // pred_check
    _
  $region31: #{gcn_forward.3} parent=0 // pred_check_branch
    %353 = sbr.rel (0) target = $region33
  $region32: #{gcn_forward.3} parent=0 // pred_region
    _
  $region33: #{gcn_forward.3} parent=0 // pred_fallthru
    _

// kernel: gcn_forward.4
$region0: #{gcn_forward.4}
  #allocation0 [shape = 'u32[]', space=smem, size = 0x4, offset = 0x4, fixed_abs, tag = 'smem constant byte address 0x4 - core index']
  #allocation1 [shape = 'u32[144,128]{1,0:T(1,128)}', space=vmem, size = 0x12000, scoped, tag = 'internal scratch']
  #allocation2 [shape = 'f32[64,32]{1,0:T(8,128)}', space=vmem, size = 0x8000, scoped, tag = 'scratch operand']
  %s0 = inlined_call_operand.vmem [shape: bf16[64,64], index: 0, kind: input, shape index: {}]
  %s1 = inlined_call_operand.vmem [shape: bf16[64,32], index: 1, kind: input, shape index: {}]
  %s2 = inlined_call_operand.vmem [shape: bf16[32,32], index: 2, kind: input, shape index: {}]
  %s3 = inlined_call_operand.vmem [shape: f32[1,32], index: 3, kind: input, shape index: {}]
  %s4 = inlined_call_operand.vmem [shape: bf16[64,32], index: 4, kind: output, shape index: {}]
  %s5 = sld [smem:[#allocation0]]
  $region34: #{gcn_forward.4} parent=0
    _
  %s7 = ssub.s32 1, %s5
  %s8 = scalar_select 0, %s7, %s5
  // Predicated region
  $region2: #{gcn_forward.4} parent=0 // pred_check
    _
  $region3: #{gcn_forward.4} parent=0 // pred_check_branch
    %10 = sbr.rel (0) target = $region5
  $region4: #{gcn_forward.4} parent=0 // pred_region
    _
  $region5: #{gcn_forward.4} parent=0 // pred_fallthru
    _
  // Predicated region
  $region6: #{gcn_forward.4} parent=0 // pred_check
    _
  $region7: #{gcn_forward.4} parent=0 // pred_check_branch
    %12 = sbr.rel (0) target = $region9
  $region8: #{gcn_forward.4} parent=0 // pred_region
    _
  $region9: #{gcn_forward.4} parent=0 // pred_fallthru
    _
  // Predicated region
  $region10: #{gcn_forward.4} parent=0 // pred_check
    _
  $region11: #{gcn_forward.4} parent=0 // pred_check_branch
    %14 = sbr.rel (0) target = $region13
  $region12: #{gcn_forward.4} parent=0 // pred_region
    _
  $region13: #{gcn_forward.4} parent=0 // pred_fallthru
    _
  // Predicated region
  $region14: #{gcn_forward.4} parent=0 // pred_check
    _
  $region15: #{gcn_forward.4} parent=0 // pred_check_branch
    %16 = sbr.rel (0) target = $region17
  $region16: #{gcn_forward.4} parent=0 // pred_region
    _
  $region17: #{gcn_forward.4} parent=0 // pred_fallthru
    _
  %p18 = scmp.eq.s32.totalorder 0, 0
  // Predicated region
  $region18: #{gcn_forward.4} parent=0 // pred_check
    %p19 = pneg %p18
  $region19: #{gcn_forward.4} parent=0 // pred_check_branch
    %21 = sbr.rel (%p19) target = $region21
  $region20: #{gcn_forward.4} parent=0 // pred_region
    %vm22 = vcmask 261120
    %23 = vst.msk [vmem:[#allocation2] sm:$0xff] %vm22, 0.0
    %24 = vst.msk [vmem:[#allocation2 + $0x8] sm:$0xff] %vm22, 0.0
    %25 = vst.msk [vmem:[#allocation2 + $0x10] sm:$0xff] %vm22, 0.0
    %26 = vst.msk [vmem:[#allocation2 + $0x18] sm:$0xff] %vm22, 0.0
    %27 = vst.msk [vmem:[#allocation2 + $0x20] sm:$0xff] %vm22, 0.0
    %28 = vst.msk [vmem:[#allocation2 + $0x28] sm:$0xff] %vm22, 0.0
    %29 = vst.msk [vmem:[#allocation2 + $0x30] sm:$0xff] %vm22, 0.0
    %30 = vst.msk [vmem:[#allocation2 + $0x38] sm:$0xff] %vm22, 0.0
  $region21: #{gcn_forward.4} parent=0 // pred_fallthru
    _
  %v31 = vld [vmem:[%s0] sm:$0xf]
  %v32 = vld [vmem:[%s0 + $0x4] sm:$0xf]
  %v33 = vld [vmem:[%s0 + $0x8] sm:$0xf]
  %v34 = vld [vmem:[%s0 + $0xc] sm:$0xf]
  %v35 = vld [vmem:[%s0 + $0x10] sm:$0xf]
  %v36 = vld [vmem:[%s0 + $0x14] sm:$0xf]
  %v37 = vld [vmem:[%s0 + $0x18] sm:$0xf]
  %v38 = vld [vmem:[%s0 + $0x1c] sm:$0xf]
  %v39 = vld [vmem:[%s1] sm:$0xf]
  %v40 = vld [vmem:[%s1 + $0x4] sm:$0xf]
  %v41 = vld [vmem:[%s1 + $0x8] sm:$0xf]
  %v42 = vld [vmem:[%s1 + $0xc] sm:$0xf]
  %v43 = vld [vmem:[%s1 + $0x10] sm:$0xf]
  %v44 = vld [vmem:[%s1 + $0x14] sm:$0xf]
  %v45 = vld [vmem:[%s1 + $0x18] sm:$0xf]
  %v46 = vld [vmem:[%s1 + $0x1c] sm:$0xf]
  %v47 = vld [vmem:[#allocation2] sm:$0xff]
  %v48 = vld [vmem:[#allocation2 + $0x8] sm:$0xff]
  %v49 = vld [vmem:[#allocation2 + $0x10] sm:$0xff]
  %v50 = vld [vmem:[#allocation2 + $0x18] sm:$0xff]
  %v51 = vld [vmem:[#allocation2 + $0x20] sm:$0xff]
  %v52 = vld [vmem:[#allocation2 + $0x28] sm:$0xff]
  %v53 = vld [vmem:[#allocation2 + $0x30] sm:$0xff]
  %v54 = vld [vmem:[#allocation2 + $0x38] sm:$0xff]
  %v63 = vunpack.c.l.b16 %v31
  %v64 = vunpack.c.l.b16 %v32
  %v65 = vunpack.c.l.b16 %v33
  %v66 = vunpack.c.l.b16 %v34
  %v67 = vunpack.c.l.b16 %v35
  %v68 = vunpack.c.l.b16 %v36
  %v69 = vunpack.c.l.b16 %v37
  %v70 = vunpack.c.l.b16 %v38
  %v71 = vpack.c.b16 %v64, %v63
  %v72 = vpack.c.b16 %v66, %v65
  %v73 = vpack.c.b16 %v68, %v67
  %v74 = vpack.c.b16 %v70, %v69
  %v83 = vunpack.c.l.b16 %v39
  %v84 = vunpack.c.l.b16 %v40
  %v85 = vunpack.c.l.b16 %v41
  %v86 = vunpack.c.l.b16 %v42
  %v87 = vunpack.c.l.b16 %v43
  %v88 = vunpack.c.l.b16 %v44
  %v89 = vunpack.c.l.b16 %v45
  %v90 = vunpack.c.l.b16 %v46
  %v91 = vpack.c.b16 %v84, %v83
  %v92 = vpack.c.b16 %v86, %v85
  %v93 = vpack.c.b16 %v88, %v87
  %v94 = vpack.c.b16 %v90, %v89
  %vm99 = vcmask 523264
  %v101 = vsel %vm99, %v71, 0
  %v104 = vsel %vm99, %v72, 0
  %v107 = vsel %vm99, %v73, 0
  %v110 = vsel %vm99, %v74, 0
  %112 = vmatprep.subr.bf16.mxu0 0
  %113 = vmatpush1.bf16.msra.mxu0 %v91
  %114 = vmatprep.subr.bf16.mxu0 0
  %115 = vmatpush1.bf16.msra.mxu0 %v92
  %116 = vmatprep.subr.bf16.mxu0 0
  %117 = vmatpush1.bf16.msra.mxu0 %v93
  %118 = vmatprep.subr.bf16.mxu0 0
  %119 = vmatpush1.bf16.msra.mxu0 %v94
  %120 = vmatprep.subr.bf16.mxu0 0
  %121 = vmatpush1.bf16.msra.mxu0 0
  %122 = vmatprep.subr.bf16.mxu0 0
  %123 = vmatpush1.bf16.msra.mxu0 0
  %124 = vmatprep.subr.bf16.mxu0 0
  %125 = vmatpush1.bf16.msra.mxu0 0
  %126 = vmatprep.subr.bf16.mxu0 0
  %127 = vmatpush1.bf16.msra.mxu0 0
  %128 = vmatprep.subr.bf16.mxu0 0
  %129 = vmatpush1.bf16.msra.mxu0 0
  %130 = vmatprep.subr.bf16.mxu0 0
  %131 = vmatpush1.bf16.msra.mxu0 0
  %132 = vmatprep.subr.bf16.mxu0 0
  %133 = vmatpush1.bf16.msra.mxu0 0
  %134 = vmatprep.subr.bf16.mxu0 0
  %135 = vmatpush1.bf16.msra.mxu0 0
  %136 = vmatprep.subr.bf16.mxu0 0
  %137 = vmatpush1.bf16.msra.mxu0 0
  %138 = vmatprep.subr.bf16.mxu0 0
  %139 = vmatpush1.bf16.msra.mxu0 0
  %140 = vmatprep.subr.bf16.mxu0 0
  %141 = vmatpush1.bf16.msra.mxu0 0
  %142 = vmatprep.subr.bf16.mxu0 0
  %143 = vmatpush1.bf16.msra.mxu0 0
  %144 = vmatprep.mubr.bf16.mxu0 0
  %145 = vmatmul.mubr.bf16.gmra.mrb[0].mxu0 %v101
  %v146 = vpop.f32.mrb[0].mxu0
  %v147 = vadd.f32 0.0, %v146
  %v148 = vpop.f32.mrb[0].mxu0
  %v149 = vpop.f32.mrb[0].mxu0
  %v150 = vadd.f32 0.0, %v149
  %v151 = vpop.f32.mrb[0].mxu0
  %152 = vmatprep.mubr.bf16.mxu0 0
  %153 = vmatmul.mubr.bf16.gmra.mrb[0].mxu0 %v104
  %v154 = vpop.f32.mrb[0].mxu0
  %v155 = vadd.f32 0.0, %v154
  %v156 = vpop.f32.mrb[0].mxu0
  %v157 = vpop.f32.mrb[0].mxu0
  %v158 = vadd.f32 0.0, %v157
  %v159 = vpop.f32.mrb[0].mxu0
  %160 = vmatprep.mubr.bf16.mxu0 0
  %161 = vmatmul.mubr.bf16.gmra.mrb[0].mxu0 %v107
  %v162 = vpop.f32.mrb[0].mxu0
  %v163 = vadd.f32 0.0, %v162
  %v164 = vpop.f32.mrb[0].mxu0
  %v165 = vpop.f32.mrb[0].mxu0
  %v166 = vadd.f32 0.0, %v165
  %v167 = vpop.f32.mrb[0].mxu0
  %168 = vmatprep.mubr.bf16.mxu0 0
  %169 = vmatmul.mubr.bf16.gmra.mrb[0].mxu0 %v110
  %v170 = vpop.f32.mrb[0].mxu0
  %v171 = vadd.f32 0.0, %v170
  %v172 = vpop.f32.mrb[0].mxu0
  %v173 = vpop.f32.mrb[0].mxu0
  %v174 = vadd.f32 0.0, %v173
  %v175 = vpop.f32.mrb[0].mxu0
  %176 = vdwg.mxu0
  %v177 = vadd.f32 %v47, %v147
  %v178 = vadd.f32 %v48, %v150
  %v179 = vadd.f32 %v49, %v155
  %v180 = vadd.f32 %v50, %v158
  %v181 = vadd.f32 %v51, %v163
  %v182 = vadd.f32 %v52, %v166
  %v183 = vadd.f32 %v53, %v171
  %v184 = vadd.f32 %v54, %v174
  %vm185 = vcmask 261120
  %186 = vst.msk [vmem:[#allocation2] sm:$0xff] %vm185, %v177
  %187 = vst.msk [vmem:[#allocation2 + $0x8] sm:$0xff] %vm185, %v178
  %188 = vst.msk [vmem:[#allocation2 + $0x10] sm:$0xff] %vm185, %v179
  %189 = vst.msk [vmem:[#allocation2 + $0x18] sm:$0xff] %vm185, %v180
  %190 = vst.msk [vmem:[#allocation2 + $0x20] sm:$0xff] %vm185, %v181
  %191 = vst.msk [vmem:[#allocation2 + $0x28] sm:$0xff] %vm185, %v182
  %192 = vst.msk [vmem:[#allocation2 + $0x30] sm:$0xff] %vm185, %v183
  %193 = vst.msk [vmem:[#allocation2 + $0x38] sm:$0xff] %vm185, %v184
  // Predicated region
  $region22: #{gcn_forward.4} parent=0 // pred_check
    %p194 = pneg %p18
  $region23: #{gcn_forward.4} parent=0 // pred_check_branch
    %196 = sbr.rel (%p194) target = $region25
  $region24: #{gcn_forward.4} parent=0 // pred_region
    %v197 = vld [vmem:[#allocation2] sm:$0xff]
    %v198 = vld [vmem:[#allocation2 + $0x8] sm:$0xff]
    %v199 = vld [vmem:[#allocation2 + $0x10] sm:$0xff]
    %v200 = vld [vmem:[#allocation2 + $0x18] sm:$0xff]
    %v201 = vld [vmem:[#allocation2 + $0x20] sm:$0xff]
    %v202 = vld [vmem:[#allocation2 + $0x28] sm:$0xff]
    %v203 = vld [vmem:[#allocation2 + $0x30] sm:$0xff]
    %v204 = vld [vmem:[#allocation2 + $0x38] sm:$0xff]
    %v205 = vpack.c.bf16 %v198, %v197
    %v206 = vpack.c.bf16 %v200, %v199
    %v207 = vpack.c.bf16 %v202, %v201
    %v208 = vpack.c.bf16 %v204, %v203
    %v209 = vld [vmem:[%s2] sm:$0xf]
    %v210 = vld [vmem:[%s2 + $0x4] sm:$0xf]
    %v211 = vld [vmem:[%s2 + $0x8] sm:$0xf]
    %v212 = vld [vmem:[%s2 + $0xc] sm:$0xf]
    %v213 = vld [vmem:[%s3] sm:$0x1]
    %v215 = vlaneseq
    %v216 = vshrl.u32 %v215, 7
    %v217 = vsub.s32 0, %v216
    %v218 = vrot.slane %v213, %v217
    %v224 = vunpack.c.l.b16 %v209
    %v225 = vunpack.c.l.b16 %v210
    %v226 = vunpack.c.l.b16 %v211
    %v227 = vunpack.c.l.b16 %v212
    %v228 = vpack.c.b16 %v225, %v224
    %v229 = vpack.c.b16 %v227, %v226
    %v233 = vsel %vm185, %v205, 0
    %v236 = vsel %vm185, %v206, 0
    %v239 = vsel %vm185, %v207, 0
    %v242 = vsel %vm185, %v208, 0
    %244 = vmatprep.subr.bf16.mxu0 0
    %245 = vmatpush1.bf16.msra.mxu0 %v228
    %246 = vmatprep.subr.bf16.mxu0 0
    %247 = vmatpush1.bf16.msra.mxu0 %v229
    %248 = vmatprep.subr.bf16.mxu0 0
    %249 = vmatpush1.bf16.msra.mxu0 0
    %250 = vmatprep.subr.bf16.mxu0 0
    %251 = vmatpush1.bf16.msra.mxu0 0
    %252 = vmatprep.subr.bf16.mxu0 0
    %253 = vmatpush1.bf16.msra.mxu0 0
    %254 = vmatprep.subr.bf16.mxu0 0
    %255 = vmatpush1.bf16.msra.mxu0 0
    %256 = vmatprep.subr.bf16.mxu0 0
    %257 = vmatpush1.bf16.msra.mxu0 0
    %258 = vmatprep.subr.bf16.mxu0 0
    %259 = vmatpush1.bf16.msra.mxu0 0
    %260 = vmatprep.subr.bf16.mxu0 0
    %261 = vmatpush1.bf16.msra.mxu0 0
    %262 = vmatprep.subr.bf16.mxu0 0
    %263 = vmatpush1.bf16.msra.mxu0 0
    %264 = vmatprep.subr.bf16.mxu0 0
    %265 = vmatpush1.bf16.msra.mxu0 0
    %266 = vmatprep.subr.bf16.mxu0 0
    %267 = vmatpush1.bf16.msra.mxu0 0
    %268 = vmatprep.subr.bf16.mxu0 0
    %269 = vmatpush1.bf16.msra.mxu0 0
    %270 = vmatprep.subr.bf16.mxu0 0
    %271 = vmatpush1.bf16.msra.mxu0 0
    %272 = vmatprep.subr.bf16.mxu0 0
    %273 = vmatpush1.bf16.msra.mxu0 0
    %274 = vmatprep.subr.bf16.mxu0 0
    %275 = vmatpush1.bf16.msra.mxu0 0
    %276 = vmatprep.mubr.bf16.mxu0 0
    %277 = vmatmul.mubr.bf16.gmra.mrb[0].mxu0 %v233
    %v278 = vpop.f32.mrb[0].mxu0
    %v279 = vadd.f32 %v218, %v278
    %v280 = vpop.f32.mrb[0].mxu0
    %v281 = vpop.f32.mrb[0].mxu0
    %v282 = vadd.f32 %v218, %v281
    %v283 = vpop.f32.mrb[0].mxu0
    %284 = vmatprep.mubr.bf16.mxu0 0
    %285 = vmatmul.mubr.bf16.gmra.mrb[0].mxu0 %v236
    %v286 = vpop.f32.mrb[0].mxu0
    %v287 = vadd.f32 %v218, %v286
    %v288 = vpop.f32.mrb[0].mxu0
    %v289 = vpop.f32.mrb[0].mxu0
    %v290 = vadd.f32 %v218, %v289
    %v291 = vpop.f32.mrb[0].mxu0
    %292 = vmatprep.mubr.bf16.mxu0 0
    %293 = vmatmul.mubr.bf16.gmra.mrb[0].mxu0 %v239
    %v294 = vpop.f32.mrb[0].mxu0
    %v295 = vadd.f32 %v218, %v294
    %v296 = vpop.f32.mrb[0].mxu0
    %v297 = vpop.f32.mrb[0].mxu0
    %v298 = vadd.f32 %v218, %v297
    %v299 = vpop.f32.mrb[0].mxu0
    %300 = vmatprep.mubr.bf16.mxu0 0
    %301 = vmatmul.mubr.bf16.gmra.mrb[0].mxu0 %v242
    %v302 = vpop.f32.mrb[0].mxu0
    %v303 = vadd.f32 %v218, %v302
    %v304 = vpop.f32.mrb[0].mxu0
    %v305 = vpop.f32.mrb[0].mxu0
    %v306 = vadd.f32 %v218, %v305
    %v307 = vpop.f32.mrb[0].mxu0
    %308 = vdwg.mxu0
    %v309 = vmax.f32 %v279, 0.0
    %v310 = vmax.f32 %v282, 0.0
    %v311 = vmax.f32 %v287, 0.0
    %v312 = vmax.f32 %v290, 0.0
    %v313 = vmax.f32 %v295, 0.0
    %v314 = vmax.f32 %v298, 0.0
    %v315 = vmax.f32 %v303, 0.0
    %v316 = vmax.f32 %v306, 0.0
    %v317 = vpack.c.bf16 %v310, %v309
    %v318 = vpack.c.bf16 %v312, %v311
    %v319 = vpack.c.bf16 %v314, %v313
    %v320 = vpack.c.bf16 %v316, %v315
    %v325 = vunpack.c.l.b16 %v317
    %v326 = vunpack.c.h.b16 %v317
    %v327 = vunpack.c.l.b16 %v318
    %v328 = vunpack.c.h.b16 %v318
    %v329 = vunpack.c.l.b16 %v319
    %v330 = vunpack.c.h.b16 %v319
    %v331 = vunpack.c.l.b16 %v320
    %v332 = vunpack.c.h.b16 %v320
    %v333 = vpack.c.b16 %v325, %v325
    %v334 = vpack.c.b16 %v326, %v326
    %v335 = vpack.c.b16 %v327, %v327
    %v336 = vpack.c.b16 %v328, %v328
    %v337 = vpack.c.b16 %v329, %v329
    %v338 = vpack.c.b16 %v330, %v330
    %v339 = vpack.c.b16 %v331, %v331
    %v340 = vpack.c.b16 %v332, %v332
    %vm349 = vcmask 257024
    %350 = vst.msk [vmem:[%s4] sm:$0xf] %vm349, %v333
    %351 = vst.msk [vmem:[%s4 + $0x4] sm:$0xf] %vm349, %v334
    %352 = vst.msk [vmem:[%s4 + $0x8] sm:$0xf] %vm349, %v335
    %353 = vst.msk [vmem:[%s4 + $0xc] sm:$0xf] %vm349, %v336
    %354 = vst.msk [vmem:[%s4 + $0x10] sm:$0xf] %vm349, %v337
    %355 = vst.msk [vmem:[%s4 + $0x14] sm:$0xf] %vm349, %v338
    %356 = vst.msk [vmem:[%s4 + $0x18] sm:$0xf] %vm349, %v339
    %357 = vst.msk [vmem:[%s4 + $0x1c] sm:$0xf] %vm349, %v340
  $region25: #{gcn_forward.4} parent=0 // pred_fallthru
    _
  // Predicated region
  $region26: #{gcn_forward.4} parent=0 // pred_check
    _
  $region27: #{gcn_forward.4} parent=0 // pred_check_branch
    %359 = sbr.rel (0) target = $region29
  $region28: #{gcn_forward.4} parent=0 // pred_region
    _
  $region29: #{gcn_forward.4} parent=0 // pred_fallthru
    _
  // Predicated region
  $region30: #{gcn_forward.4} parent=0 // pred_check
    _
  $region31: #{gcn_forward.4} parent=0 // pred_check_branch
    %361 = sbr.rel (0) target = $region33
  $region32: #{gcn_forward.4} parent=0 // pred_region
    _
  $region33: #{gcn_forward.4} parent=0 // pred_fallthru
    _

// kernel: gcn_forward.5
$region0: #{gcn_forward.5}
  #allocation0 [shape = 'u32[]', space=smem, size = 0x4, offset = 0x4, fixed_abs, tag = 'smem constant byte address 0x4 - core index']
  #allocation1 [shape = 'u32[144,128]{1,0:T(1,128)}', space=vmem, size = 0x12000, scoped, tag = 'internal scratch']
  #allocation2 [shape = 'f32[64,32]{1,0:T(8,128)}', space=vmem, size = 0x8000, scoped, tag = 'scratch operand']
  %s0 = inlined_call_operand.vmem [shape: bf16[64,64], index: 0, kind: input, shape index: {}]
  %s1 = inlined_call_operand.vmem [shape: bf16[64,32], index: 1, kind: input, shape index: {}]
  %s2 = inlined_call_operand.vmem [shape: bf16[32,128], index: 2, kind: input, shape index: {}]
  %s3 = inlined_call_operand.vmem [shape: f32[1,128], index: 3, kind: input, shape index: {}]
  %s4 = inlined_call_operand.vmem [shape: f32[64,128], index: 4, kind: output, shape index: {}]
  %s5 = sld [smem:[#allocation0]]
  $region34: #{gcn_forward.5} parent=0
    _
  %s7 = ssub.s32 1, %s5
  %s8 = scalar_select 0, %s7, %s5
  // Predicated region
  $region2: #{gcn_forward.5} parent=0 // pred_check
    _
  $region3: #{gcn_forward.5} parent=0 // pred_check_branch
    %10 = sbr.rel (0) target = $region5
  $region4: #{gcn_forward.5} parent=0 // pred_region
    _
  $region5: #{gcn_forward.5} parent=0 // pred_fallthru
    _
  // Predicated region
  $region6: #{gcn_forward.5} parent=0 // pred_check
    _
  $region7: #{gcn_forward.5} parent=0 // pred_check_branch
    %12 = sbr.rel (0) target = $region9
  $region8: #{gcn_forward.5} parent=0 // pred_region
    _
  $region9: #{gcn_forward.5} parent=0 // pred_fallthru
    _
  // Predicated region
  $region10: #{gcn_forward.5} parent=0 // pred_check
    _
  $region11: #{gcn_forward.5} parent=0 // pred_check_branch
    %14 = sbr.rel (0) target = $region13
  $region12: #{gcn_forward.5} parent=0 // pred_region
    _
  $region13: #{gcn_forward.5} parent=0 // pred_fallthru
    _
  // Predicated region
  $region14: #{gcn_forward.5} parent=0 // pred_check
    _
  $region15: #{gcn_forward.5} parent=0 // pred_check_branch
    %16 = sbr.rel (0) target = $region17
  $region16: #{gcn_forward.5} parent=0 // pred_region
    _
  $region17: #{gcn_forward.5} parent=0 // pred_fallthru
    _
  %p18 = scmp.eq.s32.totalorder 0, 0
  // Predicated region
  $region18: #{gcn_forward.5} parent=0 // pred_check
    %p19 = pneg %p18
  $region19: #{gcn_forward.5} parent=0 // pred_check_branch
    %21 = sbr.rel (%p19) target = $region21
  $region20: #{gcn_forward.5} parent=0 // pred_region
    %vm22 = vcmask 261120
    %23 = vst.msk [vmem:[#allocation2] sm:$0xff] %vm22, 0.0
    %24 = vst.msk [vmem:[#allocation2 + $0x8] sm:$0xff] %vm22, 0.0
    %25 = vst.msk [vmem:[#allocation2 + $0x10] sm:$0xff] %vm22, 0.0
    %26 = vst.msk [vmem:[#allocation2 + $0x18] sm:$0xff] %vm22, 0.0
    %27 = vst.msk [vmem:[#allocation2 + $0x20] sm:$0xff] %vm22, 0.0
    %28 = vst.msk [vmem:[#allocation2 + $0x28] sm:$0xff] %vm22, 0.0
    %29 = vst.msk [vmem:[#allocation2 + $0x30] sm:$0xff] %vm22, 0.0
    %30 = vst.msk [vmem:[#allocation2 + $0x38] sm:$0xff] %vm22, 0.0
  $region21: #{gcn_forward.5} parent=0 // pred_fallthru
    _
  %v31 = vld [vmem:[%s0] sm:$0xf]
  %v32 = vld [vmem:[%s0 + $0x4] sm:$0xf]
  %v33 = vld [vmem:[%s0 + $0x8] sm:$0xf]
  %v34 = vld [vmem:[%s0 + $0xc] sm:$0xf]
  %v35 = vld [vmem:[%s0 + $0x10] sm:$0xf]
  %v36 = vld [vmem:[%s0 + $0x14] sm:$0xf]
  %v37 = vld [vmem:[%s0 + $0x18] sm:$0xf]
  %v38 = vld [vmem:[%s0 + $0x1c] sm:$0xf]
  %v39 = vld [vmem:[%s1] sm:$0xf]
  %v40 = vld [vmem:[%s1 + $0x4] sm:$0xf]
  %v41 = vld [vmem:[%s1 + $0x8] sm:$0xf]
  %v42 = vld [vmem:[%s1 + $0xc] sm:$0xf]
  %v43 = vld [vmem:[%s1 + $0x10] sm:$0xf]
  %v44 = vld [vmem:[%s1 + $0x14] sm:$0xf]
  %v45 = vld [vmem:[%s1 + $0x18] sm:$0xf]
  %v46 = vld [vmem:[%s1 + $0x1c] sm:$0xf]
  %v47 = vld [vmem:[#allocation2] sm:$0xff]
  %v48 = vld [vmem:[#allocation2 + $0x8] sm:$0xff]
  %v49 = vld [vmem:[#allocation2 + $0x10] sm:$0xff]
  %v50 = vld [vmem:[#allocation2 + $0x18] sm:$0xff]
  %v51 = vld [vmem:[#allocation2 + $0x20] sm:$0xff]
  %v52 = vld [vmem:[#allocation2 + $0x28] sm:$0xff]
  %v53 = vld [vmem:[#allocation2 + $0x30] sm:$0xff]
  %v54 = vld [vmem:[#allocation2 + $0x38] sm:$0xff]
  %v63 = vunpack.c.l.b16 %v31
  %v64 = vunpack.c.l.b16 %v32
  %v65 = vunpack.c.l.b16 %v33
  %v66 = vunpack.c.l.b16 %v34
  %v67 = vunpack.c.l.b16 %v35
  %v68 = vunpack.c.l.b16 %v36
  %v69 = vunpack.c.l.b16 %v37
  %v70 = vunpack.c.l.b16 %v38
  %v71 = vpack.c.b16 %v64, %v63
  %v72 = vpack.c.b16 %v66, %v65
  %v73 = vpack.c.b16 %v68, %v67
  %v74 = vpack.c.b16 %v70, %v69
  %v83 = vunpack.c.l.b16 %v39
  %v84 = vunpack.c.l.b16 %v40
  %v85 = vunpack.c.l.b16 %v41
  %v86 = vunpack.c.l.b16 %v42
  %v87 = vunpack.c.l.b16 %v43
  %v88 = vunpack.c.l.b16 %v44
  %v89 = vunpack.c.l.b16 %v45
  %v90 = vunpack.c.l.b16 %v46
  %v91 = vpack.c.b16 %v84, %v83
  %v92 = vpack.c.b16 %v86, %v85
  %v93 = vpack.c.b16 %v88, %v87
  %v94 = vpack.c.b16 %v90, %v89
  %vm99 = vcmask 523264
  %v101 = vsel %vm99, %v71, 0
  %v104 = vsel %vm99, %v72, 0
  %v107 = vsel %vm99, %v73, 0
  %v110 = vsel %vm99, %v74, 0
  %112 = vmatprep.subr.bf16.mxu0 0
  %113 = vmatpush1.bf16.msra.mxu0 %v91
  %114 = vmatprep.subr.bf16.mxu0 0
  %115 = vmatpush1.bf16.msra.mxu0 %v92
  %116 = vmatprep.subr.bf16.mxu0 0
  %117 = vmatpush1.bf16.msra.mxu0 %v93
  %118 = vmatprep.subr.bf16.mxu0 0
  %119 = vmatpush1.bf16.msra.mxu0 %v94
  %120 = vmatprep.subr.bf16.mxu0 0
  %121 = vmatpush1.bf16.msra.mxu0 0
  %122 = vmatprep.subr.bf16.mxu0 0
  %123 = vmatpush1.bf16.msra.mxu0 0
  %124 = vmatprep.subr.bf16.mxu0 0
  %125 = vmatpush1.bf16.msra.mxu0 0
  %126 = vmatprep.subr.bf16.mxu0 0
  %127 = vmatpush1.bf16.msra.mxu0 0
  %128 = vmatprep.subr.bf16.mxu0 0
  %129 = vmatpush1.bf16.msra.mxu0 0
  %130 = vmatprep.subr.bf16.mxu0 0
  %131 = vmatpush1.bf16.msra.mxu0 0
  %132 = vmatprep.subr.bf16.mxu0 0
  %133 = vmatpush1.bf16.msra.mxu0 0
  %134 = vmatprep.subr.bf16.mxu0 0
  %135 = vmatpush1.bf16.msra.mxu0 0
  %136 = vmatprep.subr.bf16.mxu0 0
  %137 = vmatpush1.bf16.msra.mxu0 0
  %138 = vmatprep.subr.bf16.mxu0 0
  %139 = vmatpush1.bf16.msra.mxu0 0
  %140 = vmatprep.subr.bf16.mxu0 0
  %141 = vmatpush1.bf16.msra.mxu0 0
  %142 = vmatprep.subr.bf16.mxu0 0
  %143 = vmatpush1.bf16.msra.mxu0 0
  %144 = vmatprep.mubr.bf16.mxu0 0
  %145 = vmatmul.mubr.bf16.gmra.mrb[0].mxu0 %v101
  %v146 = vpop.f32.mrb[0].mxu0
  %v147 = vadd.f32 0.0, %v146
  %v148 = vpop.f32.mrb[0].mxu0
  %v149 = vpop.f32.mrb[0].mxu0
  %v150 = vadd.f32 0.0, %v149
  %v151 = vpop.f32.mrb[0].mxu0
  %152 = vmatprep.mubr.bf16.mxu0 0
  %153 = vmatmul.mubr.bf16.gmra.mrb[0].mxu0 %v104
  %v154 = vpop.f32.mrb[0].mxu0
  %v155 = vadd.f32 0.0, %v154
  %v156 = vpop.f32.mrb[0].mxu0
  %v157 = vpop.f32.mrb[0].mxu0
  %v158 = vadd.f32 0.0, %v157
  %v159 = vpop.f32.mrb[0].mxu0
  %160 = vmatprep.mubr.bf16.mxu0 0
  %161 = vmatmul.mubr.bf16.gmra.mrb[0].mxu0 %v107
  %v162 = vpop.f32.mrb[0].mxu0
  %v163 = vadd.f32 0.0, %v162
  %v164 = vpop.f32.mrb[0].mxu0
  %v165 = vpop.f32.mrb[0].mxu0
  %v166 = vadd.f32 0.0, %v165
  %v167 = vpop.f32.mrb[0].mxu0
  %168 = vmatprep.mubr.bf16.mxu0 0
  %169 = vmatmul.mubr.bf16.gmra.mrb[0].mxu0 %v110
  %v170 = vpop.f32.mrb[0].mxu0
  %v171 = vadd.f32 0.0, %v170
  %v172 = vpop.f32.mrb[0].mxu0
  %v173 = vpop.f32.mrb[0].mxu0
  %v174 = vadd.f32 0.0, %v173
  %v175 = vpop.f32.mrb[0].mxu0
  %176 = vdwg.mxu0
  %v177 = vadd.f32 %v47, %v147
  %v178 = vadd.f32 %v48, %v150
  %v179 = vadd.f32 %v49, %v155
  %v180 = vadd.f32 %v50, %v158
  %v181 = vadd.f32 %v51, %v163
  %v182 = vadd.f32 %v52, %v166
  %v183 = vadd.f32 %v53, %v171
  %v184 = vadd.f32 %v54, %v174
  %vm185 = vcmask 261120
  %186 = vst.msk [vmem:[#allocation2] sm:$0xff] %vm185, %v177
  %187 = vst.msk [vmem:[#allocation2 + $0x8] sm:$0xff] %vm185, %v178
  %188 = vst.msk [vmem:[#allocation2 + $0x10] sm:$0xff] %vm185, %v179
  %189 = vst.msk [vmem:[#allocation2 + $0x18] sm:$0xff] %vm185, %v180
  %190 = vst.msk [vmem:[#allocation2 + $0x20] sm:$0xff] %vm185, %v181
  %191 = vst.msk [vmem:[#allocation2 + $0x28] sm:$0xff] %vm185, %v182
  %192 = vst.msk [vmem:[#allocation2 + $0x30] sm:$0xff] %vm185, %v183
  %193 = vst.msk [vmem:[#allocation2 + $0x38] sm:$0xff] %vm185, %v184
  // Predicated region
  $region22: #{gcn_forward.5} parent=0 // pred_check
    %p194 = pneg %p18
  $region23: #{gcn_forward.5} parent=0 // pred_check_branch
    %196 = sbr.rel (%p194) target = $region25
  $region24: #{gcn_forward.5} parent=0 // pred_region
    %v197 = vld [vmem:[#allocation2] sm:$0xff]
    %v198 = vld [vmem:[#allocation2 + $0x8] sm:$0xff]
    %v199 = vld [vmem:[#allocation2 + $0x10] sm:$0xff]
    %v200 = vld [vmem:[#allocation2 + $0x18] sm:$0xff]
    %v201 = vld [vmem:[#allocation2 + $0x20] sm:$0xff]
    %v202 = vld [vmem:[#allocation2 + $0x28] sm:$0xff]
    %v203 = vld [vmem:[#allocation2 + $0x30] sm:$0xff]
    %v204 = vld [vmem:[#allocation2 + $0x38] sm:$0xff]
    %v205 = vpack.c.bf16 %v198, %v197
    %v206 = vpack.c.bf16 %v200, %v199
    %v207 = vpack.c.bf16 %v202, %v201
    %v208 = vpack.c.bf16 %v204, %v203
    %v209 = vld [vmem:[%s2] sm:$0xf]
    %v210 = vld [vmem:[%s2 + $0x4] sm:$0xf]
    %v211 = vld [vmem:[%s2 + $0x8] sm:$0xf]
    %v212 = vld [vmem:[%s2 + $0xc] sm:$0xf]
    %v213 = vld [vmem:[%s3] sm:$0x1]
    %v215 = vlaneseq
    %v216 = vshrl.u32 %v215, 7
    %v217 = vsub.s32 0, %v216
    %v218 = vrot.slane %v213, %v217
    %v224 = vunpack.c.l.b16 %v209
    %v225 = vunpack.c.l.b16 %v210
    %v226 = vunpack.c.l.b16 %v211
    %v227 = vunpack.c.l.b16 %v212
    %v228 = vpack.c.b16 %v225, %v224
    %v229 = vpack.c.b16 %v227, %v226
    %v233 = vsel %vm185, %v205, 0
    %v236 = vsel %vm185, %v206, 0
    %v239 = vsel %vm185, %v207, 0
    %v242 = vsel %vm185, %v208, 0
    %244 = vmatprep.subr.bf16.mxu0 0
    %245 = vmatpush1.bf16.msra.mxu0 %v228
    %246 = vmatprep.subr.bf16.mxu0 0
    %247 = vmatpush1.bf16.msra.mxu0 %v229
    %248 = vmatprep.subr.bf16.mxu0 0
    %249 = vmatpush1.bf16.msra.mxu0 0
    %250 = vmatprep.subr.bf16.mxu0 0
    %251 = vmatpush1.bf16.msra.mxu0 0
    %252 = vmatprep.subr.bf16.mxu0 0
    %253 = vmatpush1.bf16.msra.mxu0 0
    %254 = vmatprep.subr.bf16.mxu0 0
    %255 = vmatpush1.bf16.msra.mxu0 0
    %256 = vmatprep.subr.bf16.mxu0 0
    %257 = vmatpush1.bf16.msra.mxu0 0
    %258 = vmatprep.subr.bf16.mxu0 0
    %259 = vmatpush1.bf16.msra.mxu0 0
    %260 = vmatprep.subr.bf16.mxu0 0
    %261 = vmatpush1.bf16.msra.mxu0 0
    %262 = vmatprep.subr.bf16.mxu0 0
    %263 = vmatpush1.bf16.msra.mxu0 0
    %264 = vmatprep.subr.bf16.mxu0 0
    %265 = vmatpush1.bf16.msra.mxu0 0
    %266 = vmatprep.subr.bf16.mxu0 0
    %267 = vmatpush1.bf16.msra.mxu0 0
    %268 = vmatprep.subr.bf16.mxu0 0
    %269 = vmatpush1.bf16.msra.mxu0 0
    %270 = vmatprep.subr.bf16.mxu0 0
    %271 = vmatpush1.bf16.msra.mxu0 0
    %272 = vmatprep.subr.bf16.mxu0 0
    %273 = vmatpush1.bf16.msra.mxu0 0
    %274 = vmatprep.subr.bf16.mxu0 0
    %275 = vmatpush1.bf16.msra.mxu0 0
    %276 = vmatprep.mubr.bf16.mxu0 0
    %277 = vmatmul.mubr.bf16.gmra.mrb[0].mxu0 %v233
    %v278 = vpop.f32.mrb[0].mxu0
    %v279 = vadd.f32 %v218, %v278
    %v280 = vpop.f32.mrb[0].mxu0
    %v281 = vpop.f32.mrb[0].mxu0
    %v282 = vadd.f32 %v218, %v281
    %v283 = vpop.f32.mrb[0].mxu0
    %284 = vmatprep.mubr.bf16.mxu0 0
    %285 = vmatmul.mubr.bf16.gmra.mrb[0].mxu0 %v236
    %v286 = vpop.f32.mrb[0].mxu0
    %v287 = vadd.f32 %v218, %v286
    %v288 = vpop.f32.mrb[0].mxu0
    %v289 = vpop.f32.mrb[0].mxu0
    %v290 = vadd.f32 %v218, %v289
    %v291 = vpop.f32.mrb[0].mxu0
    %292 = vmatprep.mubr.bf16.mxu0 0
    %293 = vmatmul.mubr.bf16.gmra.mrb[0].mxu0 %v239
    %v294 = vpop.f32.mrb[0].mxu0
    %v295 = vadd.f32 %v218, %v294
    %v296 = vpop.f32.mrb[0].mxu0
    %v297 = vpop.f32.mrb[0].mxu0
    %v298 = vadd.f32 %v218, %v297
    %v299 = vpop.f32.mrb[0].mxu0
    %300 = vmatprep.mubr.bf16.mxu0 0
    %301 = vmatmul.mubr.bf16.gmra.mrb[0].mxu0 %v242
    %v302 = vpop.f32.mrb[0].mxu0
    %v303 = vadd.f32 %v218, %v302
    %v304 = vpop.f32.mrb[0].mxu0
    %v305 = vpop.f32.mrb[0].mxu0
    %v306 = vadd.f32 %v218, %v305
    %v307 = vpop.f32.mrb[0].mxu0
    %308 = vdwg.mxu0
    %309 = vmax.xlane.f32.xlu0 %v279
    %v310 = vpop.xlane.xlu0 %309
    %311 = vmax.xlane.f32.xlu0 %v282
    %v312 = vpop.xlane.xlu0 %311
    %313 = vmax.xlane.f32.xlu0 %v287
    %v314 = vpop.xlane.xlu0 %313
    %315 = vmax.xlane.f32.xlu0 %v290
    %v316 = vpop.xlane.xlu0 %315
    %317 = vmax.xlane.f32.xlu0 %v295
    %v318 = vpop.xlane.xlu0 %317
    %319 = vmax.xlane.f32.xlu0 %v298
    %v320 = vpop.xlane.xlu0 %319
    %321 = vmax.xlane.f32.xlu0 %v303
    %v322 = vpop.xlane.xlu0 %321
    %323 = vmax.xlane.f32.xlu0 %v306
    %v324 = vpop.xlane.xlu0 %323
    %v325 = vsub.f32 %v279, %v310
    %v326 = vsub.f32 %v282, %v312
    %v327 = vsub.f32 %v287, %v314
    %v328 = vsub.f32 %v290, %v316
    %v329 = vsub.f32 %v295, %v318
    %v330 = vsub.f32 %v298, %v320
    %v331 = vsub.f32 %v303, %v322
    %v332 = vsub.f32 %v306, %v324
    %v333 = vmul.f32 %v325, 1.442695
    %v334 = vpow.pop %v333
    %v335 = vmul.f32 %v326, 1.442695
    %v336 = vpow.pop %v335
    %v337 = vmul.f32 %v327, 1.442695
    %v338 = vpow.pop %v337
    %v339 = vmul.f32 %v328, 1.442695
    %v340 = vpow.pop %v339
    %v341 = vmul.f32 %v329, 1.442695
    %v342 = vpow.pop %v341
    %v343 = vmul.f32 %v330, 1.442695
    %v344 = vpow.pop %v343
    %v345 = vmul.f32 %v331, 1.442695
    %v346 = vpow.pop %v345
    %v347 = vmul.f32 %v332, 1.442695
    %v348 = vpow.pop %v347
    %349 = vadd.xlane.f32.xlu0 %v334
    %v350 = vpop.xlane.xlu0 %349
    %351 = vadd.xlane.f32.xlu0 %v336
    %v352 = vpop.xlane.xlu0 %351
    %353 = vadd.xlane.f32.xlu0 %v338
    %v354 = vpop.xlane.xlu0 %353
    %355 = vadd.xlane.f32.xlu0 %v340
    %v356 = vpop.xlane.xlu0 %355
    %357 = vadd.xlane.f32.xlu0 %v342
    %v358 = vpop.xlane.xlu0 %357
    %359 = vadd.xlane.f32.xlu0 %v344
    %v360 = vpop.xlane.xlu0 %359
    %361 = vadd.xlane.f32.xlu0 %v346
    %v362 = vpop.xlane.xlu0 %361
    %363 = vadd.xlane.f32.xlu0 %v348
    %v364 = vpop.xlane.xlu0 %363
    %v365 = vlog2.pop %v350
    %v366 = vmul.f32 %v365, 0.6931472
    %v367 = vlog2.pop %v352
    %v368 = vmul.f32 %v367, 0.6931472
    %v369 = vlog2.pop %v354
    %v370 = vmul.f32 %v369, 0.6931472
    %v371 = vlog2.pop %v356
    %v372 = vmul.f32 %v371, 0.6931472
    %v373 = vlog2.pop %v358
    %v374 = vmul.f32 %v373, 0.6931472
    %v375 = vlog2.pop %v360
    %v376 = vmul.f32 %v375, 0.6931472
    %v377 = vlog2.pop %v362
    %v378 = vmul.f32 %v377, 0.6931472
    %v379 = vlog2.pop %v364
    %v380 = vmul.f32 %v379, 0.6931472
    %v381 = vadd.f32 %v310, %v366
    %v382 = vadd.f32 %v312, %v368
    %v383 = vadd.f32 %v314, %v370
    %v384 = vadd.f32 %v316, %v372
    %v385 = vadd.f32 %v318, %v374
    %v386 = vadd.f32 %v320, %v376
    %v387 = vadd.f32 %v322, %v378
    %v388 = vadd.f32 %v324, %v380
    %v389 = vsub.f32 %v279, %v381
    %v390 = vsub.f32 %v282, %v382
    %v391 = vsub.f32 %v287, %v383
    %v392 = vsub.f32 %v290, %v384
    %v393 = vsub.f32 %v295, %v385
    %v394 = vsub.f32 %v298, %v386
    %v395 = vsub.f32 %v303, %v387
    %v396 = vsub.f32 %v306, %v388
    %397 = vst [vmem:[%s4] sm:$0xff] %v389
    %398 = vst [vmem:[%s4 + $0x8] sm:$0xff] %v390
    %399 = vst [vmem:[%s4 + $0x10] sm:$0xff] %v391
    %400 = vst [vmem:[%s4 + $0x18] sm:$0xff] %v392
    %401 = vst [vmem:[%s4 + $0x20] sm:$0xff] %v393
    %402 = vst [vmem:[%s4 + $0x28] sm:$0xff] %v394
    %403 = vst [vmem:[%s4 + $0x30] sm:$0xff] %v395
    %404 = vst [vmem:[%s4 + $0x38] sm:$0xff] %v396
  $region25: #{gcn_forward.5} parent=0 // pred_fallthru
    _
  // Predicated region
  $region26: #{gcn_forward.5} parent=0 // pred_check
    _
  $region27: #{gcn_forward.5} parent=0 // pred_check_branch
    %406 = sbr.rel (0) target = $region29
  $region28: #{gcn_forward.5} parent=0 // pred_region
    _
  $region29: #{gcn_forward.5} parent=0 // pred_fallthru
    _
  // Predicated region
  $region30: #{gcn_forward.5} parent=0 // pred_check
    _
  $region31: #{gcn_forward.5} parent=0 // pred_check_branch
    %408 = sbr.rel (0) target = $region33
  $region32: #{gcn_forward.5} parent=0 // pred_region
    _
  $region33: #{gcn_forward.5} parent=0 // pred_fallthru
    _

</llo_original>
